<compile_context>
chip_gen: v5e
topology: v5e:2x2
jax: 0.10.0
libtpu: 0.0.40
codegen_flags: <defaults>
</compile_context>

<pallas_src>
import jax
import jax.numpy as jnp
from jax.experimental import pallas as pl
from jax.experimental.pallas import tpu as pltpu


def _mlp_softmax_kernel(x_ref, w1_ref, b1_ref, w2_ref, b2_ref,
                        w3_ref, b3_ref, w4_ref, b4_ref, o_ref):
    # fc1 + ReLU (dropout1 is identity at inference)
    h = jnp.dot(x_ref[...], w1_ref[...], preferred_element_type=jnp.float32)
    h = jnp.maximum(h + b1_ref[...], 0.0)
    # fc2 + ReLU
    h = jnp.dot(h.astype(w2_ref.dtype), w2_ref[...],
                preferred_element_type=jnp.float32)
    h = jnp.maximum(h + b2_ref[...], 0.0)
    # fc3 + ReLU
    h = jnp.dot(h.astype(w3_ref.dtype), w3_ref[...],
                preferred_element_type=jnp.float32)
    h = jnp.maximum(h + b3_ref[...], 0.0)
    # fc4 (logits); padded classifier lanes carry a -1e30 bias so they vanish
    # from the softmax below.
    logits = jnp.dot(h.astype(w4_ref.dtype), w4_ref[...],
                     preferred_element_type=jnp.float32)
    logits = logits + b4_ref[...]
    # softmax over dim=1 (last axis of the [tile_b, Dp] tile), max-stabilized.
    m = jnp.max(logits, axis=-1, keepdims=True)
    e = jnp.exp(logits - m)                     # EUP
    denom = jnp.sum(e, axis=-1, keepdims=True)  # XLU lane reduce
    r = pl.reciprocal(denom, approx=True)       # EUP slot
    r = r * (2.0 - denom * r)                   # one Newton step -> near-exact
    o_ref[...] = (e * r).astype(o_ref.dtype)


def cls_model_forward(x, params, *, tile_b=256, use_bf16=True):
    """Fused MLP+softmax forward.

    x: [B, D_in] float32 (any B; batch is padded internally to a tile multiple).
    params: dict with w1..w4 stored as [in, out] and b1..b4 as [1, out]
            (PyTorch nn.Linear stores [out, in]; we keep them pre-transposed).
    """
    B, D_in = x.shape
    H = params["w1"].shape[1]
    D_out = params["w4"].shape[1]

    # ---- batch tiling: large sublane-friendly tile, pad ragged batch ----
    tb = max(8, (min(tile_b, B) // 8) * 8)
    B_pad = pl.cdiv(B, tb) * tb
    xp = x if B_pad == B else jnp.pad(x, ((0, B_pad - B), (0, 0)))

    # ---- lane-dense input: pad D_in up to a multiple of 128 ----
    D_in_p = pl.cdiv(D_in, 128) * 128
    w1 = params["w1"]
    if D_in_p != D_in:
        xp = jnp.pad(xp, ((0, 0), (0, D_in_p - D_in)))      # zero columns
        w1 = jnp.pad(w1, ((0, D_in_p - D_in), (0, 0)))       # zero rows
    # zero-padded columns x zero-padded rows -> identical fc1 result.

    # ---- lane-dense classifier head: pad D_out up to a multiple of 128 ----
    Dp = pl.cdiv(D_out, 128) * 128
    w4 = params["w4"]
    b4 = params["b4"]
    if Dp != D_out:
        w4 = jnp.pad(w4, ((0, 0), (0, Dp - D_out)))
        # Huge negative bias on padded logits -> exp() == 0 in the softmax.
        b4 = jnp.pad(b4, ((0, 0), (0, Dp - D_out)), constant_values=-1e30)

    # ---- dtype: bf16 matmul operands (f32 accumulation), f32 biases ----
    wdt = jnp.bfloat16 if use_bf16 else jnp.float32
    xp = xp.astype(wdt)
    w1 = w1.astype(wdt)
    w2 = params["w2"].astype(wdt)
    w3 = params["w3"].astype(wdt)
    w4 = w4.astype(wdt)
    b1 = params["b1"].astype(jnp.float32)
    b2 = params["b2"].astype(jnp.float32)
    b3 = params["b3"].astype(jnp.float32)
    b4 = b4.astype(jnp.float32)

    grid = (B_pad // tb,)

    def fixed(i):  # weights / biases resident every grid step
        return (0, 0)

    in_specs = [
        pl.BlockSpec((tb, D_in_p), lambda i: (i, 0)),  # x tile (lane-dense)
        pl.BlockSpec((D_in_p, H), fixed),              # w1
        pl.BlockSpec((1, H), fixed),                   # b1
        pl.BlockSpec((H, H), fixed),                   # w2
        pl.BlockSpec((1, H), fixed),                   # b2
        pl.BlockSpec((H, H), fixed),                   # w3
        pl.BlockSpec((1, H), fixed),                   # b3
        pl.BlockSpec((H, Dp), fixed),                  # w4 (lane-padded)
        pl.BlockSpec((1, Dp), fixed),                  # b4 (lane-padded)
    ]
    out_specs = pl.BlockSpec((tb, Dp), lambda i: (i, 0))

    # ---- VMEM budget: only raise the scoped limit when the tile is big ----
    wbytes = 2 if use_bf16 else 4
    vmem_est = (2 * tb * D_in_p * wbytes               # double-buffered x tile
                + 2 * tb * Dp * 4                      # double-buffered out tile
                + (D_in_p * H + 2 * H * H + H * Dp) * wbytes
                + (3 * H + Dp) * 4                     # resident weights/biases
                + 4 * tb * H * 4)                      # f32 intermediates headroom
    vmem_limit = None
    if vmem_est > 24 * 1024 * 1024:
        # Stay well under v7x's 64 MiB physical VMEM.
        vmem_limit = min(int(vmem_est * 1.5), 60 * 1024 * 1024)

    out = pl.pallas_call(
        _mlp_softmax_kernel,
        out_shape=jax.ShapeDtypeStruct((B_pad, Dp), jnp.float32),
        grid_spec=pltpu.PrefetchScalarGridSpec(
            num_scalar_prefetch=0,
            grid=grid,
            in_specs=in_specs,
            out_specs=out_specs,
        ),
        compiler_params=pltpu.CompilerParams(
            dimension_semantics=("parallel",),
            vmem_limit_bytes=vmem_limit),
    )(xp, w1, b1, w2, b2, w3, b3, w4, b4)

    return out[:B, :D_out]


def init_params(key, input_dim, output_dim, hidden=256):
    """Deterministic init matching nn.Linear's default U(-1/sqrt(fan_in), +1/sqrt(fan_in))."""
    dims = [(input_dim, hidden), (hidden, hidden), (hidden, hidden),
            (hidden, output_dim)]
    params = {}
    for idx, (fan_in, fan_out) in enumerate(dims, start=1):
        key, kw, kb = jax.random.split(key, 3)
        bound = 1.0 / jnp.sqrt(jnp.float32(fan_in))
        params[f"w{idx}"] = jax.random.uniform(
            kw, (fan_in, fan_out), jnp.float32, -bound, bound)
        params[f"b{idx}"] = jax.random.uniform(
            kb, (1, fan_out), jnp.float32, -bound, bound)
    return params


def _reference(x, p):
    h = jnp.maximum(x @ p["w1"] + p["b1"], 0.0)
    h = jnp.maximum(h @ p["w2"] + p["b2"], 0.0)
    h = jnp.maximum(h @ p["w3"] + p["b3"], 0.0)
    logits = h @ p["w4"] + p["b4"]
    return jax.nn.softmax(logits, axis=1)


if __name__ == "__main__":
    key = jax.random.PRNGKey(0)
    k_x, k_x2, k_p = jax.random.split(key, 3)

    D_in, D_out = 32, 10
    params = init_params(k_p, D_in, D_out)

    # Main case: grid of 2 steps at tile_b=256 (exercises pipelining/megacore).
    B = 512
    x = jax.random.normal(k_x, (B, D_in), jnp.float32)
    ref = _reference(x, params)

    out_bf16 = jax.block_until_ready(
        cls_model_forward(x, params, tile_b=256, use_bf16=True))
    out_f32 = jax.block_until_ready(
        cls_model_forward(x, params, tile_b=256, use_bf16=False))

    assert out_bf16.shape == (B, D_out)
    assert out_f32.shape == (B, D_out)
    # f32 path is near-exact vs the XLA reference.
    assert jnp.allclose(out_f32, ref, atol=1e-4, rtol=1e-4)
    # bf16 matmul operands (f32 accumulation) -> loose tolerance on probabilities.
    assert jnp.allclose(out_bf16, ref, atol=3e-2, rtol=3e-2)
    # Rows of a softmax sum to 1 (padded classifier lanes contribute nothing).
    assert jnp.allclose(jnp.sum(out_f32, axis=1), jnp.ones((B,)), atol=1e-5)
    assert jnp.allclose(jnp.sum(out_bf16, axis=1), jnp.ones((B,)), atol=1e-5)

    # Small ragged batch: exercises tile clamping + batch zero-padding path.
    x2 = jax.random.normal(k_x2, (12, D_in), jnp.float32)
    out2 = jax.block_until_ready(cls_model_forward(x2, params, use_bf16=True))
    ref2 = _reference(x2, params)
    assert out2.shape == (12, D_out)
    assert jnp.allclose(out2, ref2, atol=3e-2, rtol=3e-2)

    print("KERNEL_OK")
</pallas_src>

<mosaic_0001>
module attributes {stable_mosaic.version = 11 : i64} {
  func.func @_mlp_softmax_kernel(%arg0: i32, %arg1: memref<256x128xbf16, #tpu.memory_space<vmem>>, %arg2: memref<128x256xbf16, #tpu.memory_space<vmem>>, %arg3: memref<1x256xf32, #tpu.memory_space<vmem>>, %arg4: memref<256x256xbf16, #tpu.memory_space<vmem>>, %arg5: memref<1x256xf32, #tpu.memory_space<vmem>>, %arg6: memref<256x256xbf16, #tpu.memory_space<vmem>>, %arg7: memref<1x256xf32, #tpu.memory_space<vmem>>, %arg8: memref<256x128xbf16, #tpu.memory_space<vmem>>, %arg9: memref<1x128xf32, #tpu.memory_space<vmem>>, %arg10: memref<256x128xf32, #tpu.memory_space<vmem>>) attributes {dimension_semantics = [#tpu.dimension_semantics<parallel>], iteration_bounds = array<i64: 2>, scalar_prefetch = 0 : i64, scratch_operands = 0 : i64, tpu.core_type = #tpu.core_type<tc>, window_params = [{transform_indices = @transform_0, window_bounds = array<i64: 256, 128>}, {pipeline_mode = #tpu.pipeline_mode<synchronous>, transform_indices = @transform_1, window_bounds = array<i64: 128, 256>}, {pipeline_mode = #tpu.pipeline_mode<synchronous>, transform_indices = @transform_2, window_bounds = array<i64: 1, 256>}, {pipeline_mode = #tpu.pipeline_mode<synchronous>, transform_indices = @transform_3, window_bounds = array<i64: 256, 256>}, {pipeline_mode = #tpu.pipeline_mode<synchronous>, transform_indices = @transform_4, window_bounds = array<i64: 1, 256>}, {pipeline_mode = #tpu.pipeline_mode<synchronous>, transform_indices = @transform_5, window_bounds = array<i64: 256, 256>}, {pipeline_mode = #tpu.pipeline_mode<synchronous>, transform_indices = @transform_6, window_bounds = array<i64: 1, 256>}, {pipeline_mode = #tpu.pipeline_mode<synchronous>, transform_indices = @transform_7, window_bounds = array<i64: 256, 128>}, {pipeline_mode = #tpu.pipeline_mode<synchronous>, transform_indices = @transform_8, window_bounds = array<i64: 1, 128>}, {transform_indices = @transform_9, window_bounds = array<i64: 256, 128>}]} {
    %c0 = arith.constant 0 : index
    %c0_0 = arith.constant 0 : index
    %0 = vector.load %arg1[%c0, %c0_0] : memref<256x128xbf16, #tpu.memory_space<vmem>>, vector<256x128xbf16>
    %c0_1 = arith.constant 0 : index
    %c0_2 = arith.constant 0 : index
    %1 = vector.load %arg2[%c0_1, %c0_2] : memref<128x256xbf16, #tpu.memory_space<vmem>>, vector<128x256xbf16>
    %cst = arith.constant dense<0.000000e+00> : vector<256x256xf32>
    %2 = tpu.matmul %0, %1, %cst {dimension_numbers = #tpu.dot_dimension_numbers<[1], [0], [0], [1], [0, 0, 1, 1], [], []>} : vector<256x128xbf16>, vector<128x256xbf16>, vector<256x256xf32> -> vector<256x256xf32>
    %c0_3 = arith.constant 0 : index
    %c0_4 = arith.constant 0 : index
    %3 = vector.load %arg3[%c0_3, %c0_4] : memref<1x256xf32, #tpu.memory_space<vmem>>, vector<1x256xf32>
    %4 = vector.broadcast %3 : vector<1x256xf32> to vector<256x256xf32>
    %5 = arith.addf %2, %4 : vector<256x256xf32>
    %cst_5 = arith.constant 0.000000e+00 : f32
    %6 = vector.broadcast %cst_5 : f32 to vector<256x256xf32>
    %7 = arith.maximumf %5, %6 : vector<256x256xf32>
    %8 = arith.truncf %7 : vector<256x256xf32> to vector<256x256xbf16>
    %c0_6 = arith.constant 0 : index
    %c0_7 = arith.constant 0 : index
    %9 = vector.load %arg4[%c0_6, %c0_7] : memref<256x256xbf16, #tpu.memory_space<vmem>>, vector<256x256xbf16>
    %cst_8 = arith.constant dense<0.000000e+00> : vector<256x256xf32>
    %10 = tpu.matmul %8, %9, %cst_8 {dimension_numbers = #tpu.dot_dimension_numbers<[1], [0], [0], [1], [0, 0, 1, 1], [], []>} : vector<256x256xbf16>, vector<256x256xbf16>, vector<256x256xf32> -> vector<256x256xf32>
    %c0_9 = arith.constant 0 : index
    %c0_10 = arith.constant 0 : index
    %11 = vector.load %arg5[%c0_9, %c0_10] : memref<1x256xf32, #tpu.memory_space<vmem>>, vector<1x256xf32>
    %12 = vector.broadcast %11 : vector<1x256xf32> to vector<256x256xf32>
    %13 = arith.addf %10, %12 : vector<256x256xf32>
    %cst_11 = arith.constant 0.000000e+00 : f32
    %14 = vector.broadcast %cst_11 : f32 to vector<256x256xf32>
    %15 = arith.maximumf %13, %14 : vector<256x256xf32>
    %16 = arith.truncf %15 : vector<256x256xf32> to vector<256x256xbf16>
    %c0_12 = arith.constant 0 : index
    %c0_13 = arith.constant 0 : index
    %17 = vector.load %arg6[%c0_12, %c0_13] : memref<256x256xbf16, #tpu.memory_space<vmem>>, vector<256x256xbf16>
    %cst_14 = arith.constant dense<0.000000e+00> : vector<256x256xf32>
    %18 = tpu.matmul %16, %17, %cst_14 {dimension_numbers = #tpu.dot_dimension_numbers<[1], [0], [0], [1], [0, 0, 1, 1], [], []>} : vector<256x256xbf16>, vector<256x256xbf16>, vector<256x256xf32> -> vector<256x256xf32>
    %c0_15 = arith.constant 0 : index
    %c0_16 = arith.constant 0 : index
    %19 = vector.load %arg7[%c0_15, %c0_16] : memref<1x256xf32, #tpu.memory_space<vmem>>, vector<1x256xf32>
    %20 = vector.broadcast %19 : vector<1x256xf32> to vector<256x256xf32>
    %21 = arith.addf %18, %20 : vector<256x256xf32>
    %cst_17 = arith.constant 0.000000e+00 : f32
    %22 = vector.broadcast %cst_17 : f32 to vector<256x256xf32>
    %23 = arith.maximumf %21, %22 : vector<256x256xf32>
    %24 = arith.truncf %23 : vector<256x256xf32> to vector<256x256xbf16>
    %c0_18 = arith.constant 0 : index
    %c0_19 = arith.constant 0 : index
    %25 = vector.load %arg8[%c0_18, %c0_19] : memref<256x128xbf16, #tpu.memory_space<vmem>>, vector<256x128xbf16>
    %cst_20 = arith.constant dense<0.000000e+00> : vector<256x128xf32>
    %26 = tpu.matmul %24, %25, %cst_20 {dimension_numbers = #tpu.dot_dimension_numbers<[1], [0], [0], [1], [0, 0, 1, 1], [], []>} : vector<256x256xbf16>, vector<256x128xbf16>, vector<256x128xf32> -> vector<256x128xf32>
    %c0_21 = arith.constant 0 : index
    %c0_22 = arith.constant 0 : index
    %27 = vector.load %arg9[%c0_21, %c0_22] : memref<1x128xf32, #tpu.memory_space<vmem>>, vector<1x128xf32>
    %28 = vector.broadcast %27 : vector<1x128xf32> to vector<256x128xf32>
    %29 = arith.addf %26, %28 : vector<256x128xf32>
    %cst_23 = arith.constant dense<0xFF800000> : vector<256xf32>
    %30 = vector.multi_reduction <maximumf>, %29, %cst_23 [1] : vector<256x128xf32> to vector<256xf32>
    %31 = vector.shape_cast %30 : vector<256xf32> to vector<256x1xf32>
    %32 = vector.broadcast %31 : vector<256x1xf32> to vector<256x128xf32>
    %33 = arith.subf %29, %32 : vector<256x128xf32>
    %34 = math.exp %33 : vector<256x128xf32>
    %cst_24 = arith.constant dense<0.000000e+00> : vector<256xf32>
    %35 = vector.multi_reduction <add>, %34, %cst_24 [1] : vector<256x128xf32> to vector<256xf32>
    %36 = vector.shape_cast %35 : vector<256xf32> to vector<256x1xf32>
    %37 = tpu.reciprocal %36 {approx = true} : vector<256x1xf32> -> vector<256x1xf32>
    %38 = arith.mulf %36, %37 : vector<256x1xf32>
    %cst_25 = arith.constant 2.000000e+00 : f32
    %39 = vector.broadcast %cst_25 : f32 to vector<256x1xf32>
    %40 = arith.subf %39, %38 : vector<256x1xf32>
    %41 = arith.mulf %37, %40 : vector<256x1xf32>
    %42 = vector.broadcast %41 : vector<256x1xf32> to vector<256x128xf32>
    %43 = arith.mulf %34, %42 : vector<256x128xf32>
    %c0_26 = arith.constant 0 : index
    %c0_27 = arith.constant 0 : index
    %44 = vector.load %arg10[%c0_26, %c0_27] : memref<256x128xf32, #tpu.memory_space<vmem>>, vector<256x128xf32>
    tpu.vector_store %arg10[%c0_26, %c0_27], %43 {strides = array<i32>} : memref<256x128xf32, #tpu.memory_space<vmem>>, vector<256x128xf32>,
    return
  }
  func.func @transform_0(%arg0: i32) -> (i32, i32) {
    %c0_i32 = arith.constant 0 : i32
    %c0_i32_0 = arith.constant 0 : i32
    return %arg0, %c0_i32 : i32, i32
  }
  func.func @transform_1(%arg0: i32) -> (i32, i32) {
    %c0_i32 = arith.constant 0 : i32
    %c0_i32_0 = arith.constant 0 : i32
    %c0_i32_1 = arith.constant 0 : i32
    return %c0_i32, %c0_i32_0 : i32, i32
  }
  func.func @transform_2(%arg0: i32) -> (i32, i32) {
    %c0_i32 = arith.constant 0 : i32
    %c0_i32_0 = arith.constant 0 : i32
    %c0_i32_1 = arith.constant 0 : i32
    return %c0_i32, %c0_i32_0 : i32, i32
  }
  func.func @transform_3(%arg0: i32) -> (i32, i32) {
    %c0_i32 = arith.constant 0 : i32
    %c0_i32_0 = arith.constant 0 : i32
    %c0_i32_1 = arith.constant 0 : i32
    return %c0_i32, %c0_i32_0 : i32, i32
  }
  func.func @transform_4(%arg0: i32) -> (i32, i32) {
    %c0_i32 = arith.constant 0 : i32
    %c0_i32_0 = arith.constant 0 : i32
    %c0_i32_1 = arith.constant 0 : i32
    return %c0_i32, %c0_i32_0 : i32, i32
  }
  func.func @transform_5(%arg0: i32) -> (i32, i32) {
    %c0_i32 = arith.constant 0 : i32
    %c0_i32_0 = arith.constant 0 : i32
    %c0_i32_1 = arith.constant 0 : i32
    return %c0_i32, %c0_i32_0 : i32, i32
  }
  func.func @transform_6(%arg0: i32) -> (i32, i32) {
    %c0_i32 = arith.constant 0 : i32
    %c0_i32_0 = arith.constant 0 : i32
    %c0_i32_1 = arith.constant 0 : i32
    return %c0_i32, %c0_i32_0 : i32, i32
  }
  func.func @transform_7(%arg0: i32) -> (i32, i32) {
    %c0_i32 = arith.constant 0 : i32
    %c0_i32_0 = arith.constant 0 : i32
    %c0_i32_1 = arith.constant 0 : i32
    return %c0_i32, %c0_i32_0 : i32, i32
  }
  func.func @transform_8(%arg0: i32) -> (i32, i32) {
    %c0_i32 = arith.constant 0 : i32
    %c0_i32_0 = arith.constant 0 : i32
    %c0_i32_1 = arith.constant 0 : i32
    return %c0_i32, %c0_i32_0 : i32, i32
  }
  func.func @transform_9(%arg0: i32) -> (i32, i32) {
    %c0_i32 = arith.constant 0 : i32
    %c0_i32_0 = arith.constant 0 : i32
    return %arg0, %c0_i32 : i32, i32
  }
}

</mosaic_0001>

<llo_original>
// kernel: tpu_custom_call.1
$region0: #{tpu_custom_call.1}
  #allocation0 [shape = 'u32[]', space=smem, size = 0x4, offset = 0x4, fixed_abs, tag = 'smem constant byte address 0x4 - core index']
  #allocation1 [shape = 'u32[72,128]{1,0:T(1,128)}', space=vmem, size = 0x9000, scoped, tag = 'internal scratch']
  %s0 = inlined_call_operand.hbm [shape: bf16[512,128], index: 0, kind: input, shape index: {}]
  %s1 = inlined_call_operand.hbm [shape: bf16[128,256], index: 1, kind: input, shape index: {}]
  %s2 = inlined_call_operand.hbm [shape: f32[1,256], index: 2, kind: input, shape index: {}]
  %s3 = inlined_call_operand.hbm [shape: bf16[256,256], index: 3, kind: input, shape index: {}]
  %s4 = inlined_call_operand.vmem [shape: f32[1,256], index: 4, kind: input, shape index: {}]
  %s5 = inlined_call_operand.hbm [shape: bf16[256,256], index: 5, kind: input, shape index: {}]
  %s6 = inlined_call_operand.vmem [shape: f32[1,256], index: 6, kind: input, shape index: {}]
  %s7 = inlined_call_operand.hbm [shape: bf16[256,128], index: 7, kind: input, shape index: {}]
  %s8 = inlined_call_operand.vmem [shape: f32[1,128], index: 8, kind: input, shape index: {}]
  %s9 = inlined_call_operand.hbm [shape: f32[512,128], index: 9, kind: output, shape index: {}]
  %s10 = sld [smem:[#allocation0]]
  $region93: #{tpu_custom_call.1} parent=0
    _
  %s12 = ssub.s32 1, %s10
  %s13 = scalar_select 0, %s12, %s10
  $region1: #{tpu_custom_call.1} parent=0
    #allocation2 [shape = 'u8[131072]{0}', space=vmem, size = 0x20000, scoped, tag = 'input window, operand 0']
    #allocation3 [shape = 's32[2]{0}', space=sflag, size = 0x8, scoped, tag = 'scoped memory for tpu_custom_call.1']
    #allocation4 [shape = 's32[2]{0}', space=sflag, size = 0x8, scoped, tag = 'scoped memory for tpu_custom_call.1']
    #allocation5 [shape = 'u8[65536]{0}', space=vmem, size = 0x10000, scoped, tag = 'input window, operand 1, single buffered']
    #allocation6 [shape = 's32[1]{0}', space=sflag, size = 0x4, scoped, tag = 'scoped memory for tpu_custom_call.1']
    #allocation7 [shape = 'u8[1024]{0}', space=vmem, size = 0x400, scoped, tag = 'input window, operand 2, single buffered']
    #allocation8 [shape = 'u8[131072]{0}', space=vmem, size = 0x20000, scoped, tag = 'input window, operand 3, single buffered']
    #allocation9 [shape = 's32[1]{0}', space=sflag, size = 0x4, scoped, tag = 'scoped memory for tpu_custom_call.1']
    #allocation10 [shape = 'u8[131072]{0}', space=vmem, size = 0x20000, scoped, tag = 'input window, operand 5, single buffered']
    #allocation11 [shape = 'u8[65536]{0}', space=vmem, size = 0x10000, scoped, tag = 'input window, operand 7, single buffered']
    #allocation12 [shape = 's32[1]{0}', space=sflag, size = 0x4, scoped, tag = 'scoped memory for tpu_custom_call.1']
    #allocation13 [shape = 'u8[262144]{0}', space=vmem, size = 0x40000, scoped, tag = 'output window, operand 0']
    %14 = vsyncpa [#allocation3], 0
    %s15 = scalar_lea.sflag [#allocation3], 1
    %16 = vsyncpa %s15, 0
    %17 = vsyncpa [#allocation6], 0
    %18 = vsyncpa [#allocation9], 0
    %19 = vsyncpa [#allocation12], 0
    %20 = vsyncpa [#allocation4], 0
    %s21 = scalar_lea.sflag [#allocation4], 1
    %22 = vsyncpa %s21, 0
    loop: start=0, step=1, limit=4
    $region2: #{tpu_custom_call.1} parent=1 // loop_pre_header
      _
    $region3: #{tpu_custom_call.1} parent=1 // loop_header
      %s24 = sphi 0, %s28
      %p25 = scmp.ge.s32.totalorder %s24, 4
      %s34 = sphi 0, %s36
      %s37 = sphi 0, %s34
      %s38 = sphi 0, %s37
      %s54 = sphi 0, %s38
      %s58 = sphi 0, %s58
      %s60 = sphi 0, %s58
      %s61 = sphi 0, %s60
      %s75 = sphi 0, %s61
      %s79 = sphi 0, %s79
      %s81 = sphi 0, %s79
      %s82 = sphi 0, %s81
      %s96 = sphi 0, %s82
      %s100 = sphi 0, %s100
      %s102 = sphi 0, %s100
      %s103 = sphi 0, %s102
      %s117 = sphi 0, %s103
      %s121 = sphi 0, %s121
      %s123 = sphi 0, %s121
      %s124 = sphi 0, %s123
      %s138 = sphi 0, %s124
      %s142 = sphi 0, %s142
      %s144 = sphi 0, %s142
      %s145 = sphi 0, %s144
      %s159 = sphi 0, %s145
      %s163 = sphi 0, %s163
      %s165 = sphi 0, %s163
      %s166 = sphi 0, %s165
      %s180 = sphi 0, %s166
      %s184 = sphi 0, %s184
      %s186 = sphi 0, %s184
      %s187 = sphi 0, %s186
      %s201 = sphi 0, %s187
      %s205 = sphi 0, %s205
      %s207 = sphi 0, %s205
      %s208 = sphi 0, %s207
      %s222 = sphi 0, %s208
      %s228 = sphi 0, %s230
      %s231 = sphi 0, %s228
      %s232 = sphi 0, %s231
      %s248 = sphi 0, %s232
    $region4: #{tpu_custom_call.1} parent=1 // loop_header_branch
      %27 = sbr.rel (%p25) target = $region8
    $region5: #{tpu_custom_call.1} parent=1 // loop_body
      %s29 = ssub.s32 %s24, 1
      %s30 = ssub.s32 %s24, 2
      %s31 = sadd.s32 %s24, 1
      %s32 = ssub.s32 %s24, %s31
      %p33 = scmp.eq.s32.totalorder %s32, 0
      %s35 = sadd.s32 %s34, 1
      %s36 = scalar_select %p33, %s34, %s35
      %p39 = pneg %p33
      %p40 = scmp.eq.s32.totalorder %s24, 1
      %p41 = por %p39, %p40
      %p42 = scmp.ne.s32.totalorder %s34, %s37
      %p43 = scmp.eq.s32.totalorder %s24, 0
      %p44 = por %p42, %p43
      %p45 = scmp.ne.s32.totalorder %s34, %s37
      %p46 = scmp.eq.s32.totalorder %s29, 1
      %p47 = por %p45, %p46
      %p48 = scmp.ne.s32.totalorder %s37, %s38
      %p49 = scmp.eq.s32.totalorder %s29, 0
      %p50 = por %p48, %p49
      %p51 = scmp.ne.s32.totalorder %s37, %s38
      %p52 = scmp.eq.s32.totalorder %s30, 1
      %p53 = por %p51, %p52
      %p55 = scmp.ne.s32.totalorder %s38, %s54
      %p56 = scmp.eq.s32.totalorder %s30, 0
      %p57 = por %p55, %p56
      %s59 = sadd.s32 %s58, 1
      %p62 = scmp.eq.s32.totalorder %s24, 1
      %p63 = scmp.ne.s32.totalorder %s58, %s60
      %p64 = scmp.eq.s32.totalorder %s24, 0
      %p65 = por %p63, %p64
      %p66 = scmp.ne.s32.totalorder %s58, %s60
      %p67 = scmp.eq.s32.totalorder %s29, 1
      %p68 = por %p66, %p67
      %p69 = scmp.ne.s32.totalorder %s60, %s61
      %p70 = scmp.eq.s32.totalorder %s29, 0
      %p71 = por %p69, %p70
      %p72 = scmp.ne.s32.totalorder %s60, %s61
      %p73 = scmp.eq.s32.totalorder %s30, 1
      %p74 = por %p72, %p73
      %p76 = scmp.ne.s32.totalorder %s61, %s75
      %p77 = scmp.eq.s32.totalorder %s30, 0
      %p78 = por %p76, %p77
      %s80 = sadd.s32 %s79, 1
      %p83 = scmp.eq.s32.totalorder %s24, 1
      %p84 = scmp.ne.s32.totalorder %s79, %s81
      %p85 = scmp.eq.s32.totalorder %s24, 0
      %p86 = por %p84, %p85
      %p87 = scmp.ne.s32.totalorder %s79, %s81
      %p88 = scmp.eq.s32.totalorder %s29, 1
      %p89 = por %p87, %p88
      %p90 = scmp.ne.s32.totalorder %s81, %s82
      %p91 = scmp.eq.s32.totalorder %s29, 0
      %p92 = por %p90, %p91
      %p93 = scmp.ne.s32.totalorder %s81, %s82
      %p94 = scmp.eq.s32.totalorder %s30, 1
      %p95 = por %p93, %p94
      %p97 = scmp.ne.s32.totalorder %s82, %s96
      %p98 = scmp.eq.s32.totalorder %s30, 0
      %p99 = por %p97, %p98
      %s101 = sadd.s32 %s100, 1
      %p104 = scmp.eq.s32.totalorder %s24, 1
      %p105 = scmp.ne.s32.totalorder %s100, %s102
      %p106 = scmp.eq.s32.totalorder %s24, 0
      %p107 = por %p105, %p106
      %p108 = scmp.ne.s32.totalorder %s100, %s102
      %p109 = scmp.eq.s32.totalorder %s29, 1
      %p110 = por %p108, %p109
      %p111 = scmp.ne.s32.totalorder %s102, %s103
      %p112 = scmp.eq.s32.totalorder %s29, 0
      %p113 = por %p111, %p112
      %p114 = scmp.ne.s32.totalorder %s102, %s103
      %p115 = scmp.eq.s32.totalorder %s30, 1
      %p116 = por %p114, %p115
      %p118 = scmp.ne.s32.totalorder %s103, %s117
      %p119 = scmp.eq.s32.totalorder %s30, 0
      %p120 = por %p118, %p119
      %s122 = sadd.s32 %s121, 1
      %p125 = scmp.eq.s32.totalorder %s24, 1
      %p126 = scmp.ne.s32.totalorder %s121, %s123
      %p127 = scmp.eq.s32.totalorder %s24, 0
      %p128 = por %p126, %p127
      %p129 = scmp.ne.s32.totalorder %s121, %s123
      %p130 = scmp.eq.s32.totalorder %s29, 1
      %p131 = por %p129, %p130
      %p132 = scmp.ne.s32.totalorder %s123, %s124
      %p133 = scmp.eq.s32.totalorder %s29, 0
      %p134 = por %p132, %p133
      %p135 = scmp.ne.s32.totalorder %s123, %s124
      %p136 = scmp.eq.s32.totalorder %s30, 1
      %p137 = por %p135, %p136
      %p139 = scmp.ne.s32.totalorder %s124, %s138
      %p140 = scmp.eq.s32.totalorder %s30, 0
      %p141 = por %p139, %p140
      %s143 = sadd.s32 %s142, 1
      %p146 = scmp.eq.s32.totalorder %s24, 1
      %p147 = scmp.ne.s32.totalorder %s142, %s144
      %p148 = scmp.eq.s32.totalorder %s24, 0
      %p149 = por %p147, %p148
      %p150 = scmp.ne.s32.totalorder %s142, %s144
      %p151 = scmp.eq.s32.totalorder %s29, 1
      %p152 = por %p150, %p151
      %p153 = scmp.ne.s32.totalorder %s144, %s145
      %p154 = scmp.eq.s32.totalorder %s29, 0
      %p155 = por %p153, %p154
      %p156 = scmp.ne.s32.totalorder %s144, %s145
      %p157 = scmp.eq.s32.totalorder %s30, 1
      %p158 = por %p156, %p157
      %p160 = scmp.ne.s32.totalorder %s145, %s159
      %p161 = scmp.eq.s32.totalorder %s30, 0
      %p162 = por %p160, %p161
      %s164 = sadd.s32 %s163, 1
      %p167 = scmp.eq.s32.totalorder %s24, 1
      %p168 = scmp.ne.s32.totalorder %s163, %s165
      %p169 = scmp.eq.s32.totalorder %s24, 0
      %p170 = por %p168, %p169
      %p171 = scmp.ne.s32.totalorder %s163, %s165
      %p172 = scmp.eq.s32.totalorder %s29, 1
      %p173 = por %p171, %p172
      %p174 = scmp.ne.s32.totalorder %s165, %s166
      %p175 = scmp.eq.s32.totalorder %s29, 0
      %p176 = por %p174, %p175
      %p177 = scmp.ne.s32.totalorder %s165, %s166
      %p178 = scmp.eq.s32.totalorder %s30, 1
      %p179 = por %p177, %p178
      %p181 = scmp.ne.s32.totalorder %s166, %s180
      %p182 = scmp.eq.s32.totalorder %s30, 0
      %p183 = por %p181, %p182
      %s185 = sadd.s32 %s184, 1
      %p188 = scmp.eq.s32.totalorder %s24, 1
      %p189 = scmp.ne.s32.totalorder %s184, %s186
      %p190 = scmp.eq.s32.totalorder %s24, 0
      %p191 = por %p189, %p190
      %p192 = scmp.ne.s32.totalorder %s184, %s186
      %p193 = scmp.eq.s32.totalorder %s29, 1
      %p194 = por %p192, %p193
      %p195 = scmp.ne.s32.totalorder %s186, %s187
      %p196 = scmp.eq.s32.totalorder %s29, 0
      %p197 = por %p195, %p196
      %p198 = scmp.ne.s32.totalorder %s186, %s187
      %p199 = scmp.eq.s32.totalorder %s30, 1
      %p200 = por %p198, %p199
      %p202 = scmp.ne.s32.totalorder %s187, %s201
      %p203 = scmp.eq.s32.totalorder %s30, 0
      %p204 = por %p202, %p203
      %s206 = sadd.s32 %s205, 1
      %p209 = scmp.eq.s32.totalorder %s24, 1
      %p210 = scmp.ne.s32.totalorder %s205, %s207
      %p211 = scmp.eq.s32.totalorder %s24, 0
      %p212 = por %p210, %p211
      %p213 = scmp.ne.s32.totalorder %s205, %s207
      %p214 = scmp.eq.s32.totalorder %s29, 1
      %p215 = por %p213, %p214
      %p216 = scmp.ne.s32.totalorder %s207, %s208
      %p217 = scmp.eq.s32.totalorder %s29, 0
      %p218 = por %p216, %p217
      %p219 = scmp.ne.s32.totalorder %s207, %s208
      %p220 = scmp.eq.s32.totalorder %s30, 1
      %p221 = por %p219, %p220
      %p223 = scmp.ne.s32.totalorder %s208, %s222
      %p224 = scmp.eq.s32.totalorder %s30, 0
      %p225 = por %p223, %p224
      %s226 = ssub.s32 %s24, %s31
      %p227 = scmp.eq.s32.totalorder %s226, 0
      %s229 = sadd.s32 %s228, 1
      %s230 = scalar_select %p227, %s228, %s229
      %p233 = pneg %p227
      %p234 = scmp.eq.s32.totalorder %s24, 1
      %p235 = por %p233, %p234
      %p236 = scmp.ne.s32.totalorder %s228, %s231
      %p237 = scmp.eq.s32.totalorder %s24, 0
      %p238 = por %p236, %p237
      %p239 = scmp.ne.s32.totalorder %s228, %s231
      %p240 = scmp.eq.s32.totalorder %s29, 1
      %p241 = por %p239, %p240
      %p242 = scmp.ne.s32.totalorder %s231, %s232
      %p243 = scmp.eq.s32.totalorder %s29, 0
      %p244 = por %p242, %p243
      %p245 = scmp.ne.s32.totalorder %s231, %s232
      %p246 = scmp.eq.s32.totalorder %s30, 1
      %p247 = por %p245, %p246
      %p249 = scmp.ne.s32.totalorder %s232, %s248
      %p250 = scmp.eq.s32.totalorder %s30, 0
      %p251 = por %p249, %p250
      %p252 = scmp.le.s32.totalorder 1, %s24
      %p253 = scmp.lt.s32.totalorder %s24, 3
      %p254 = pnand %p252, %p253
      %p255 = pneg %p254
      // Predicated region
      $region9: #{tpu_custom_call.1} parent=5 // pred_check
        _
      $region10: #{tpu_custom_call.1} parent=5 // pred_check_branch
        %257 = sbr.rel (%p254) target = $region12
      $region11: #{tpu_custom_call.1} parent=5 // pred_region
        %s258 = ssub.s32 %s24, 1
        // Predicated region
        $region13: #{tpu_custom_call.1} parent=11 // pred_check
          %p259 = pneg %p71
        $region14: #{tpu_custom_call.1} parent=11 // pred_check_branch
          %261 = sbr.rel (%p259) target = $region16
        $region15: #{tpu_custom_call.1} parent=11 // pred_region
          %263 = vsyncadd [#allocation6], 0
          %s264 = sshll.u32 %s1, 4
          %s265 = int_to_ptr.hbm [resolvable:$true] %s264
          %s266 = sshll.u32 [#allocation5], 4
          %s267 = int_to_ptr.vmem [resolvable:$true] %s266
          %272 = dma.hbm_to_vmem [thread:$0]  %s265, 2048, %s267, [#allocation6], 128, 128, 8
        $region16: #{tpu_custom_call.1} parent=11 // pred_fallthru
          _
        // Predicated region
        $region17: #{tpu_custom_call.1} parent=11 // pred_check
          %p273 = pneg %p92
        $region18: #{tpu_custom_call.1} parent=11 // pred_check_branch
          %275 = sbr.rel (%p273) target = $region20
        $region19: #{tpu_custom_call.1} parent=11 // pred_region
          %277 = vsyncadd [#allocation6], 0
          %s279 = sshll.u32 %s2, 4
          %s280 = int_to_ptr.hbm [resolvable:$true] %s279
          %s281 = sshll.u32 [#allocation7], 4
          %s282 = int_to_ptr.vmem [resolvable:$true] %s281
          %284 = dma.hbm_to_vmem [thread:$0]  %s280, 32, %s282, [#allocation6]
        $region20: #{tpu_custom_call.1} parent=11 // pred_fallthru
          _
        // Predicated region
        $region21: #{tpu_custom_call.1} parent=11 // pred_check
          %p285 = pneg %p113
        $region22: #{tpu_custom_call.1} parent=11 // pred_check_branch
          %287 = sbr.rel (%p285) target = $region24
        $region23: #{tpu_custom_call.1} parent=11 // pred_region
          %289 = vsyncadd [#allocation9], 0
          %s290 = sshll.u32 %s3, 4
          %s291 = int_to_ptr.hbm [resolvable:$true] %s290
          %s292 = sshll.u32 [#allocation8], 4
          %s293 = int_to_ptr.vmem [resolvable:$true] %s292
          %298 = dma.hbm_to_vmem [thread:$0]  %s291, 4096, %s293, [#allocation9], 128, 128, 8
        $region24: #{tpu_custom_call.1} parent=11 // pred_fallthru
          _
        // Predicated region
        $region25: #{tpu_custom_call.1} parent=11 // pred_check
          %p299 = pneg %p134
        $region26: #{tpu_custom_call.1} parent=11 // pred_check_branch
          %301 = sbr.rel (%p299) target = $region28
        $region27: #{tpu_custom_call.1} parent=11 // pred_region
          _
        $region28: #{tpu_custom_call.1} parent=11 // pred_fallthru
          _
        // Predicated region
        $region29: #{tpu_custom_call.1} parent=11 // pred_check
          %p302 = pneg %p155
        $region30: #{tpu_custom_call.1} parent=11 // pred_check_branch
          %304 = sbr.rel (%p302) target = $region32
        $region31: #{tpu_custom_call.1} parent=11 // pred_region
          %306 = vsyncadd [#allocation9], 0
          %s307 = sshll.u32 %s5, 4
          %s308 = int_to_ptr.hbm [resolvable:$true] %s307
          %s309 = sshll.u32 [#allocation10], 4
          %s310 = int_to_ptr.vmem [resolvable:$true] %s309
          %315 = dma.hbm_to_vmem [thread:$0]  %s308, 4096, %s310, [#allocation9], 128, 128, 8
        $region32: #{tpu_custom_call.1} parent=11 // pred_fallthru
          _
        // Predicated region
        $region33: #{tpu_custom_call.1} parent=11 // pred_check
          %p316 = pneg %p176
        $region34: #{tpu_custom_call.1} parent=11 // pred_check_branch
          %318 = sbr.rel (%p316) target = $region36
        $region35: #{tpu_custom_call.1} parent=11 // pred_region
          _
        $region36: #{tpu_custom_call.1} parent=11 // pred_fallthru
          _
        // Predicated region
        $region37: #{tpu_custom_call.1} parent=11 // pred_check
          %p319 = pneg %p197
        $region38: #{tpu_custom_call.1} parent=11 // pred_check_branch
          %321 = sbr.rel (%p319) target = $region40
        $region39: #{tpu_custom_call.1} parent=11 // pred_region
          %323 = vsyncadd [#allocation12], 0
          %s324 = sshll.u32 %s7, 4
          %s325 = int_to_ptr.hbm [resolvable:$true] %s324
          %s326 = sshll.u32 [#allocation11], 4
          %s327 = int_to_ptr.vmem [resolvable:$true] %s326
          %332 = dma.hbm_to_vmem [thread:$0]  %s325, 2048, %s327, [#allocation12], 64, 64, 4
        $region40: #{tpu_custom_call.1} parent=11 // pred_fallthru
          _
        // Predicated region
        $region41: #{tpu_custom_call.1} parent=11 // pred_check
          %p333 = pneg %p218
        $region42: #{tpu_custom_call.1} parent=11 // pred_check_branch
          %335 = sbr.rel (%p333) target = $region44
        $region43: #{tpu_custom_call.1} parent=11 // pred_region
          _
        $region44: #{tpu_custom_call.1} parent=11 // pred_fallthru
          _
      $region12: #{tpu_custom_call.1} parent=5 // pred_fallthru
        _
      %p336 = scmp.lt.s32.totalorder %s24, 2
      // Predicated region
      $region45: #{tpu_custom_call.1} parent=5 // pred_check
        %p337 = pneg %p336
      $region46: #{tpu_custom_call.1} parent=5 // pred_check_branch
        %339 = sbr.rel (%p337) target = $region48
      $region47: #{tpu_custom_call.1} parent=5 // pred_region
        // Predicated region
        $region49: #{tpu_custom_call.1} parent=47 // pred_check
          %p340 = pneg %p44
        $region50: #{tpu_custom_call.1} parent=47 // pred_check_branch
          %342 = sbr.rel (%p340) target = $region52
        $region51: #{tpu_custom_call.1} parent=47 // pred_region
          %s343 = sand.u32 %s34, 1
          %s344 = scalar_lea.sflag [#allocation3], %s343
          %s345 = sand.u32 %s34, 1
          %s346 = smul.addr %s345, 128
          %s347 = scalar_lea.vmem [#allocation2], %s346
          %s348 = smul.u32 32, %s24
          %350 = vsyncadd %s344, 0
          %s351 = smul.addr %s348, 4
          %s352 = scalar_lea.hbm %s0, %s351
          %s353 = sshll.u32 %s352, 4
          %s354 = int_to_ptr.hbm [resolvable:$true] %s353
          %s355 = sshll.u32 %s347, 4
          %s356 = int_to_ptr.vmem [resolvable:$true] %s355
          %361 = dma.hbm_to_vmem [thread:$0]  %s354, 2048, %s356, %s344, 64, 64, 4
        $region52: #{tpu_custom_call.1} parent=47 // pred_fallthru
          _
      $region48: #{tpu_custom_call.1} parent=5 // pred_fallthru
        _
      %p362 = scmp.le.s32.totalorder 1, %s24
      %p363 = scmp.lt.s32.totalorder %s24, 3
      %p364 = pnand %p362, %p363
      %p365 = pneg %p364
      // Predicated region
      $region53: #{tpu_custom_call.1} parent=5 // pred_check
        _
      $region54: #{tpu_custom_call.1} parent=5 // pred_check_branch
        %367 = sbr.rel (%p364) target = $region56
      $region55: #{tpu_custom_call.1} parent=5 // pred_region
        %s368 = ssub.s32 %s24, 1
        %s369 = sand.u32 %s37, 1
        %s370 = scalar_lea.sflag [#allocation3], %s369
        %s371 = sand.u32 %s37, 1
        %s372 = smul.addr %s371, 128
        %s373 = scalar_lea.vmem [#allocation2], %s372
        // Predicated region
        $region57: #{tpu_custom_call.1} parent=55 // pred_check
          %p374 = pneg %p50
        $region58: #{tpu_custom_call.1} parent=55 // pred_check_branch
          %376 = sbr.rel (%p374) target = $region60
        $region59: #{tpu_custom_call.1} parent=55 // pred_region
          %378 = dma.done %s370, 2048
        $region60: #{tpu_custom_call.1} parent=55 // pred_fallthru
          _
        // Predicated region
        $region61: #{tpu_custom_call.1} parent=55 // pred_check
          %p379 = pneg %p71
        $region62: #{tpu_custom_call.1} parent=55 // pred_check_branch
          %381 = sbr.rel (%p379) target = $region64
        $region63: #{tpu_custom_call.1} parent=55 // pred_region
          %383 = dma.done [#allocation6], 2048
        $region64: #{tpu_custom_call.1} parent=55 // pred_fallthru
          _
        // Predicated region
        $region65: #{tpu_custom_call.1} parent=55 // pred_check
          %p384 = pneg %p92
        $region66: #{tpu_custom_call.1} parent=55 // pred_check_branch
          %386 = sbr.rel (%p384) target = $region68
        $region67: #{tpu_custom_call.1} parent=55 // pred_region
          %388 = dma.done [#allocation6], 32
        $region68: #{tpu_custom_call.1} parent=55 // pred_fallthru
          _
        // Predicated region
        $region69: #{tpu_custom_call.1} parent=55 // pred_check
          %p389 = pneg %p113
        $region70: #{tpu_custom_call.1} parent=55 // pred_check_branch
          %391 = sbr.rel (%p389) target = $region72
        $region71: #{tpu_custom_call.1} parent=55 // pred_region
          %393 = dma.done [#allocation9], 4096
        $region72: #{tpu_custom_call.1} parent=55 // pred_fallthru
          _
        // Predicated region
        $region73: #{tpu_custom_call.1} parent=55 // pred_check
          %p394 = pneg %p155
        $region74: #{tpu_custom_call.1} parent=55 // pred_check_branch
          %396 = sbr.rel (%p394) target = $region76
        $region75: #{tpu_custom_call.1} parent=55 // pred_region
          %398 = dma.done [#allocation9], 4096
        $region76: #{tpu_custom_call.1} parent=55 // pred_fallthru
          _
        // Predicated region
        $region77: #{tpu_custom_call.1} parent=55 // pred_check
          %p399 = pneg %p197
        $region78: #{tpu_custom_call.1} parent=55 // pred_check_branch
          %401 = sbr.rel (%p399) target = $region80
        $region79: #{tpu_custom_call.1} parent=55 // pred_region
          %403 = dma.done [#allocation12], 2048
        $region80: #{tpu_custom_call.1} parent=55 // pred_fallthru
          _
        %s404 = sand.u32 %s37, 1
        %s405 = scalar_lea.sflag [#allocation3], %s404
        %s406 = sand.u32 %s37, 1
        %s407 = smul.addr %s406, 128
        %s408 = scalar_lea.vmem [#allocation2], %s407
        %p409 = pneg %p50
        %p410 = pneg %p47
        %p411 = pneg %p71
        %p412 = pneg %p68
        %p413 = pneg %p92
        %p414 = pneg %p89
        %p415 = pneg %p113
        %p416 = pneg %p110
        %p417 = pneg %p134
        %p418 = pneg %p131
        %p419 = pneg %p155
        %p420 = pneg %p152
        %p421 = pneg %p176
        %p422 = pneg %p173
        %p423 = pneg %p197
        %p424 = pneg %p194
        %p425 = pneg %p218
        %p426 = pneg %p215
        %p427 = pneg %p244
        %p428 = pneg %p241
        %s429 = sand.u32 %s231, 1
        %s430 = scalar_lea.sflag [#allocation4], %s429
        %s431 = sand.u32 %s231, 1
        %s432 = smul.addr %s431, 256
        %s433 = scalar_lea.vmem [#allocation13], %s432
        %s434 = smul.u32 32, %s29
        %s435 = smul.u32 32, %s29
        %v436 = vld [vmem:[%s373] sm:$0xf]
        %v437 = vld [vmem:[%s373 + $0x4] sm:$0xf]
        %v438 = vld [vmem:[%s373 + $0x8] sm:$0xf]
        %v439 = vld [vmem:[%s373 + $0xc] sm:$0xf]
        %v440 = vld [vmem:[%s373 + $0x10] sm:$0xf]
        %v441 = vld [vmem:[%s373 + $0x14] sm:$0xf]
        %v442 = vld [vmem:[%s373 + $0x18] sm:$0xf]
        %v443 = vld [vmem:[%s373 + $0x1c] sm:$0xf]
        %v444 = vld [vmem:[%s373 + $0x20] sm:$0xf]
        %v445 = vld [vmem:[%s373 + $0x24] sm:$0xf]
        %v446 = vld [vmem:[%s373 + $0x28] sm:$0xf]
        %v447 = vld [vmem:[%s373 + $0x2c] sm:$0xf]
        %v448 = vld [vmem:[%s373 + $0x30] sm:$0xf]
        %v449 = vld [vmem:[%s373 + $0x34] sm:$0xf]
        %v450 = vld [vmem:[%s373 + $0x38] sm:$0xf]
        %v451 = vld [vmem:[%s373 + $0x3c] sm:$0xf]
        %v452 = vld [vmem:[%s373 + $0x40] sm:$0xf]
        %v453 = vld [vmem:[%s373 + $0x44] sm:$0xf]
        %v454 = vld [vmem:[%s373 + $0x48] sm:$0xf]
        %v455 = vld [vmem:[%s373 + $0x4c] sm:$0xf]
        %v456 = vld [vmem:[%s373 + $0x50] sm:$0xf]
        %v457 = vld [vmem:[%s373 + $0x54] sm:$0xf]
        %v458 = vld [vmem:[%s373 + $0x58] sm:$0xf]
        %v459 = vld [vmem:[%s373 + $0x5c] sm:$0xf]
        %v460 = vld [vmem:[%s373 + $0x60] sm:$0xf]
        %v461 = vld [vmem:[%s373 + $0x64] sm:$0xf]
        %v462 = vld [vmem:[%s373 + $0x68] sm:$0xf]
        %v463 = vld [vmem:[%s373 + $0x6c] sm:$0xf]
        %v464 = vld [vmem:[%s373 + $0x70] sm:$0xf]
        %v465 = vld [vmem:[%s373 + $0x74] sm:$0xf]
        %v466 = vld [vmem:[%s373 + $0x78] sm:$0xf]
        %v467 = vld [vmem:[%s373 + $0x7c] sm:$0xf]
        %v468 = vld [vmem:[#allocation5] sm:$0xff]
        %v469 = vld [vmem:[#allocation5 + $0x8] sm:$0xff]
        %v470 = vld [vmem:[#allocation5 + $0x10] sm:$0xff]
        %v471 = vld [vmem:[#allocation5 + $0x18] sm:$0xff]
        %v472 = vld [vmem:[#allocation5 + $0x20] sm:$0xff]
        %v473 = vld [vmem:[#allocation5 + $0x28] sm:$0xff]
        %v474 = vld [vmem:[#allocation5 + $0x30] sm:$0xff]
        %v475 = vld [vmem:[#allocation5 + $0x38] sm:$0xff]
        %v476 = vld [vmem:[#allocation5 + $0x40] sm:$0xff]
        %v477 = vld [vmem:[#allocation5 + $0x48] sm:$0xff]
        %v478 = vld [vmem:[#allocation5 + $0x50] sm:$0xff]
        %v479 = vld [vmem:[#allocation5 + $0x58] sm:$0xff]
        %v480 = vld [vmem:[#allocation5 + $0x60] sm:$0xff]
        %v481 = vld [vmem:[#allocation5 + $0x68] sm:$0xff]
        %v482 = vld [vmem:[#allocation5 + $0x70] sm:$0xff]
        %v483 = vld [vmem:[#allocation5 + $0x78] sm:$0xff]
        %v484 = vld [vmem:[#allocation7] sm:$0x3]
        %v486 = vperm.slane %v484, 0
        %v487 = vperm.slane %v484, 1
        %v522 = vunpack.c.l.b16 %v436
        %v523 = vunpack.c.l.b16 %v437
        %v524 = vunpack.c.l.b16 %v438
        %v525 = vunpack.c.l.b16 %v439
        %v526 = vunpack.c.l.b16 %v440
        %v527 = vunpack.c.l.b16 %v441
        %v528 = vunpack.c.l.b16 %v442
        %v529 = vunpack.c.l.b16 %v443
        %v530 = vunpack.c.l.b16 %v444
        %v531 = vunpack.c.l.b16 %v445
        %v532 = vunpack.c.l.b16 %v446
        %v533 = vunpack.c.l.b16 %v447
        %v534 = vunpack.c.l.b16 %v448
        %v535 = vunpack.c.l.b16 %v449
        %v536 = vunpack.c.l.b16 %v450
        %v537 = vunpack.c.l.b16 %v451
        %v538 = vunpack.c.l.b16 %v452
        %v539 = vunpack.c.l.b16 %v453
        %v540 = vunpack.c.l.b16 %v454
        %v541 = vunpack.c.l.b16 %v455
        %v542 = vunpack.c.l.b16 %v456
        %v543 = vunpack.c.l.b16 %v457
        %v544 = vunpack.c.l.b16 %v458
        %v545 = vunpack.c.l.b16 %v459
        %v546 = vunpack.c.l.b16 %v460
        %v547 = vunpack.c.l.b16 %v461
        %v548 = vunpack.c.l.b16 %v462
        %v549 = vunpack.c.l.b16 %v463
        %v550 = vunpack.c.l.b16 %v464
        %v551 = vunpack.c.l.b16 %v465
        %v552 = vunpack.c.l.b16 %v466
        %v553 = vunpack.c.l.b16 %v467
        %v554 = vpack.c.b16 %v523, %v522
        %v555 = vpack.c.b16 %v525, %v524
        %v556 = vpack.c.b16 %v527, %v526
        %v557 = vpack.c.b16 %v529, %v528
        %v558 = vpack.c.b16 %v531, %v530
        %v559 = vpack.c.b16 %v533, %v532
        %v560 = vpack.c.b16 %v535, %v534
        %v561 = vpack.c.b16 %v537, %v536
        %v562 = vpack.c.b16 %v539, %v538
        %v563 = vpack.c.b16 %v541, %v540
        %v564 = vpack.c.b16 %v543, %v542
        %v565 = vpack.c.b16 %v545, %v544
        %v566 = vpack.c.b16 %v547, %v546
        %v567 = vpack.c.b16 %v549, %v548
        %v568 = vpack.c.b16 %v551, %v550
        %v569 = vpack.c.b16 %v553, %v552
        %v602 = vunpack.c.l.b16 %v468
        %v603 = vunpack.c.h.b16 %v468
        %v604 = vunpack.c.l.b16 %v469
        %v605 = vunpack.c.h.b16 %v469
        %v606 = vunpack.c.l.b16 %v470
        %v607 = vunpack.c.h.b16 %v470
        %v608 = vunpack.c.l.b16 %v471
        %v609 = vunpack.c.h.b16 %v471
        %v610 = vunpack.c.l.b16 %v472
        %v611 = vunpack.c.h.b16 %v472
        %v612 = vunpack.c.l.b16 %v473
        %v613 = vunpack.c.h.b16 %v473
        %v614 = vunpack.c.l.b16 %v474
        %v615 = vunpack.c.h.b16 %v474
        %v616 = vunpack.c.l.b16 %v475
        %v617 = vunpack.c.h.b16 %v475
        %v618 = vunpack.c.l.b16 %v476
        %v619 = vunpack.c.h.b16 %v476
        %v620 = vunpack.c.l.b16 %v477
        %v621 = vunpack.c.h.b16 %v477
        %v622 = vunpack.c.l.b16 %v478
        %v623 = vunpack.c.h.b16 %v478
        %v624 = vunpack.c.l.b16 %v479
        %v625 = vunpack.c.h.b16 %v479
        %v626 = vunpack.c.l.b16 %v480
        %v627 = vunpack.c.h.b16 %v480
        %v628 = vunpack.c.l.b16 %v481
        %v629 = vunpack.c.h.b16 %v481
        %v630 = vunpack.c.l.b16 %v482
        %v631 = vunpack.c.h.b16 %v482
        %v632 = vunpack.c.l.b16 %v483
        %v633 = vunpack.c.h.b16 %v483
        %v634 = vpack.c.b16 %v604, %v602
        %v635 = vpack.c.b16 %v605, %v603
        %v636 = vpack.c.b16 %v608, %v606
        %v637 = vpack.c.b16 %v609, %v607
        %v638 = vpack.c.b16 %v612, %v610
        %v639 = vpack.c.b16 %v613, %v611
        %v640 = vpack.c.b16 %v616, %v614
        %v641 = vpack.c.b16 %v617, %v615
        %v642 = vpack.c.b16 %v620, %v618
        %v643 = vpack.c.b16 %v621, %v619
        %v644 = vpack.c.b16 %v624, %v622
        %v645 = vpack.c.b16 %v625, %v623
        %v646 = vpack.c.b16 %v628, %v626
        %v647 = vpack.c.b16 %v629, %v627
        %v648 = vpack.c.b16 %v632, %v630
        %v649 = vpack.c.b16 %v633, %v631
        %666 = vmatpush.bf16.msra.mxu0 %v648
        %667 = vmatpush.bf16.msra.mxu0 %v646
        %668 = vmatpush.bf16.msra.mxu0 %v644
        %669 = vmatpush.bf16.msra.mxu0 %v642
        %670 = vmatpush.bf16.msra.mxu0 %v640
        %671 = vmatpush.bf16.msra.mxu0 %v638
        %672 = vmatpush.bf16.msra.mxu0 %v636
        %673 = vmatpush.bf16.msra.mxu0 %v634
        %674 = vmatmul.bf16.gmra.mxu0 %v554
        %v675 = vpop.f32.mrf.mxu0
        %v676 = vadd.f32 %v486, %v675
        %v677 = vpop.f32.mrf.mxu0
        %v678 = vadd.f32 %v486, %v677
        %679 = vmatmul.bf16.gmra.mxu0 %v555
        %v680 = vpop.f32.mrf.mxu0
        %v681 = vadd.f32 %v486, %v680
        %v682 = vpop.f32.mrf.mxu0
        %v683 = vadd.f32 %v486, %v682
        %684 = vmatmul.bf16.gmra.mxu0 %v556
        %v685 = vpop.f32.mrf.mxu0
        %v686 = vadd.f32 %v486, %v685
        %v687 = vpop.f32.mrf.mxu0
        %v688 = vadd.f32 %v486, %v687
        %689 = vmatmul.bf16.gmra.mxu0 %v557
        %v690 = vpop.f32.mrf.mxu0
        %v691 = vadd.f32 %v486, %v690
        %v692 = vpop.f32.mrf.mxu0
        %v693 = vadd.f32 %v486, %v692
        %694 = vmatmul.bf16.gmra.mxu0 %v558
        %v695 = vpop.f32.mrf.mxu0
        %v696 = vadd.f32 %v486, %v695
        %v697 = vpop.f32.mrf.mxu0
        %v698 = vadd.f32 %v486, %v697
        %699 = vmatmul.bf16.gmra.mxu0 %v559
        %v700 = vpop.f32.mrf.mxu0
        %v701 = vadd.f32 %v486, %v700
        %v702 = vpop.f32.mrf.mxu0
        %v703 = vadd.f32 %v486, %v702
        %704 = vmatmul.bf16.gmra.mxu0 %v560
        %v705 = vpop.f32.mrf.mxu0
        %v706 = vadd.f32 %v486, %v705
        %v707 = vpop.f32.mrf.mxu0
        %v708 = vadd.f32 %v486, %v707
        %709 = vmatmul.bf16.gmra.mxu0 %v561
        %v710 = vpop.f32.mrf.mxu0
        %v711 = vadd.f32 %v486, %v710
        %v712 = vpop.f32.mrf.mxu0
        %v713 = vadd.f32 %v486, %v712
        %714 = vmatmul.bf16.gmra.mxu0 %v562
        %v715 = vpop.f32.mrf.mxu0
        %v716 = vadd.f32 %v486, %v715
        %v717 = vpop.f32.mrf.mxu0
        %v718 = vadd.f32 %v486, %v717
        %719 = vmatmul.bf16.gmra.mxu0 %v563
        %v720 = vpop.f32.mrf.mxu0
        %v721 = vadd.f32 %v486, %v720
        %v722 = vpop.f32.mrf.mxu0
        %v723 = vadd.f32 %v486, %v722
        %724 = vmatmul.bf16.gmra.mxu0 %v564
        %v725 = vpop.f32.mrf.mxu0
        %v726 = vadd.f32 %v486, %v725
        %v727 = vpop.f32.mrf.mxu0
        %v728 = vadd.f32 %v486, %v727
        %729 = vmatmul.bf16.gmra.mxu0 %v565
        %v730 = vpop.f32.mrf.mxu0
        %v731 = vadd.f32 %v486, %v730
        %v732 = vpop.f32.mrf.mxu0
        %v733 = vadd.f32 %v486, %v732
        %734 = vmatmul.bf16.gmra.mxu0 %v566
        %v735 = vpop.f32.mrf.mxu0
        %v736 = vadd.f32 %v486, %v735
        %v737 = vpop.f32.mrf.mxu0
        %v738 = vadd.f32 %v486, %v737
        %739 = vmatmul.bf16.gmra.mxu0 %v567
        %v740 = vpop.f32.mrf.mxu0
        %v741 = vadd.f32 %v486, %v740
        %v742 = vpop.f32.mrf.mxu0
        %v743 = vadd.f32 %v486, %v742
        %744 = vmatmul.bf16.gmra.mxu0 %v568
        %v745 = vpop.f32.mrf.mxu0
        %v746 = vadd.f32 %v486, %v745
        %v747 = vpop.f32.mrf.mxu0
        %v748 = vadd.f32 %v486, %v747
        %749 = vmatmul.bf16.gmra.mxu0 %v569
        %v750 = vpop.f32.mrf.mxu0
        %v751 = vadd.f32 %v486, %v750
        %v752 = vpop.f32.mrf.mxu0
        %v753 = vadd.f32 %v486, %v752
        %754 = vdwg.mxu0
        %755 = vmatpush.bf16.msra.mxu0 %v649
        %756 = vmatpush.bf16.msra.mxu0 %v647
        %757 = vmatpush.bf16.msra.mxu0 %v645
        %758 = vmatpush.bf16.msra.mxu0 %v643
        %759 = vmatpush.bf16.msra.mxu0 %v641
        %760 = vmatpush.bf16.msra.mxu0 %v639
        %761 = vmatpush.bf16.msra.mxu0 %v637
        %762 = vmatpush.bf16.msra.mxu0 %v635
        %763 = vmatmul.bf16.gmra.mxu0 %v554
        %v764 = vpop.f32.mrf.mxu0
        %v765 = vadd.f32 %v487, %v764
        %v766 = vpop.f32.mrf.mxu0
        %v767 = vadd.f32 %v487, %v766
        %768 = vmatmul.bf16.gmra.mxu0 %v555
        %v769 = vpop.f32.mrf.mxu0
        %v770 = vadd.f32 %v487, %v769
        %v771 = vpop.f32.mrf.mxu0
        %v772 = vadd.f32 %v487, %v771
        %773 = vmatmul.bf16.gmra.mxu0 %v556
        %v774 = vpop.f32.mrf.mxu0
        %v775 = vadd.f32 %v487, %v774
        %v776 = vpop.f32.mrf.mxu0
        %v777 = vadd.f32 %v487, %v776
        %778 = vmatmul.bf16.gmra.mxu0 %v557
        %v779 = vpop.f32.mrf.mxu0
        %v780 = vadd.f32 %v487, %v779
        %v781 = vpop.f32.mrf.mxu0
        %v782 = vadd.f32 %v487, %v781
        %783 = vmatmul.bf16.gmra.mxu0 %v558
        %v784 = vpop.f32.mrf.mxu0
        %v785 = vadd.f32 %v487, %v784
        %v786 = vpop.f32.mrf.mxu0
        %v787 = vadd.f32 %v487, %v786
        %788 = vmatmul.bf16.gmra.mxu0 %v559
        %v789 = vpop.f32.mrf.mxu0
        %v790 = vadd.f32 %v487, %v789
        %v791 = vpop.f32.mrf.mxu0
        %v792 = vadd.f32 %v487, %v791
        %793 = vmatmul.bf16.gmra.mxu0 %v560
        %v794 = vpop.f32.mrf.mxu0
        %v795 = vadd.f32 %v487, %v794
        %v796 = vpop.f32.mrf.mxu0
        %v797 = vadd.f32 %v487, %v796
        %798 = vmatmul.bf16.gmra.mxu0 %v561
        %v799 = vpop.f32.mrf.mxu0
        %v800 = vadd.f32 %v487, %v799
        %v801 = vpop.f32.mrf.mxu0
        %v802 = vadd.f32 %v487, %v801
        %803 = vmatmul.bf16.gmra.mxu0 %v562
        %v804 = vpop.f32.mrf.mxu0
        %v805 = vadd.f32 %v487, %v804
        %v806 = vpop.f32.mrf.mxu0
        %v807 = vadd.f32 %v487, %v806
        %808 = vmatmul.bf16.gmra.mxu0 %v563
        %v809 = vpop.f32.mrf.mxu0
        %v810 = vadd.f32 %v487, %v809
        %v811 = vpop.f32.mrf.mxu0
        %v812 = vadd.f32 %v487, %v811
        %813 = vmatmul.bf16.gmra.mxu0 %v564
        %v814 = vpop.f32.mrf.mxu0
        %v815 = vadd.f32 %v487, %v814
        %v816 = vpop.f32.mrf.mxu0
        %v817 = vadd.f32 %v487, %v816
        %818 = vmatmul.bf16.gmra.mxu0 %v565
        %v819 = vpop.f32.mrf.mxu0
        %v820 = vadd.f32 %v487, %v819
        %v821 = vpop.f32.mrf.mxu0
        %v822 = vadd.f32 %v487, %v821
        %823 = vmatmul.bf16.gmra.mxu0 %v566
        %v824 = vpop.f32.mrf.mxu0
        %v825 = vadd.f32 %v487, %v824
        %v826 = vpop.f32.mrf.mxu0
        %v827 = vadd.f32 %v487, %v826
        %828 = vmatmul.bf16.gmra.mxu0 %v567
        %v829 = vpop.f32.mrf.mxu0
        %v830 = vadd.f32 %v487, %v829
        %v831 = vpop.f32.mrf.mxu0
        %v832 = vadd.f32 %v487, %v831
        %833 = vmatmul.bf16.gmra.mxu0 %v568
        %v834 = vpop.f32.mrf.mxu0
        %v835 = vadd.f32 %v487, %v834
        %v836 = vpop.f32.mrf.mxu0
        %v837 = vadd.f32 %v487, %v836
        %838 = vmatmul.bf16.gmra.mxu0 %v569
        %v839 = vpop.f32.mrf.mxu0
        %v840 = vadd.f32 %v487, %v839
        %v841 = vpop.f32.mrf.mxu0
        %v842 = vadd.f32 %v487, %v841
        %843 = vdwg.mxu0
        %v844 = vmax.f32 %v676, 0.0
        %v845 = vmax.f32 %v765, 0.0
        %v846 = vmax.f32 %v678, 0.0
        %v847 = vmax.f32 %v767, 0.0
        %v848 = vmax.f32 %v681, 0.0
        %v849 = vmax.f32 %v770, 0.0
        %v850 = vmax.f32 %v683, 0.0
        %v851 = vmax.f32 %v772, 0.0
        %v852 = vmax.f32 %v686, 0.0
        %v853 = vmax.f32 %v775, 0.0
        %v854 = vmax.f32 %v688, 0.0
        %v855 = vmax.f32 %v777, 0.0
        %v856 = vmax.f32 %v691, 0.0
        %v857 = vmax.f32 %v780, 0.0
        %v858 = vmax.f32 %v693, 0.0
        %v859 = vmax.f32 %v782, 0.0
        %v860 = vmax.f32 %v696, 0.0
        %v861 = vmax.f32 %v785, 0.0
        %v862 = vmax.f32 %v698, 0.0
        %v863 = vmax.f32 %v787, 0.0
        %v864 = vmax.f32 %v701, 0.0
        %v865 = vmax.f32 %v790, 0.0
        %v866 = vmax.f32 %v703, 0.0
        %v867 = vmax.f32 %v792, 0.0
        %v868 = vmax.f32 %v706, 0.0
        %v869 = vmax.f32 %v795, 0.0
        %v870 = vmax.f32 %v708, 0.0
        %v871 = vmax.f32 %v797, 0.0
        %v872 = vmax.f32 %v711, 0.0
        %v873 = vmax.f32 %v800, 0.0
        %v874 = vmax.f32 %v713, 0.0
        %v875 = vmax.f32 %v802, 0.0
        %v876 = vmax.f32 %v716, 0.0
        %v877 = vmax.f32 %v805, 0.0
        %v878 = vmax.f32 %v718, 0.0
        %v879 = vmax.f32 %v807, 0.0
        %v880 = vmax.f32 %v721, 0.0
        %v881 = vmax.f32 %v810, 0.0
        %v882 = vmax.f32 %v723, 0.0
        %v883 = vmax.f32 %v812, 0.0
        %v884 = vmax.f32 %v726, 0.0
        %v885 = vmax.f32 %v815, 0.0
        %v886 = vmax.f32 %v728, 0.0
        %v887 = vmax.f32 %v817, 0.0
        %v888 = vmax.f32 %v731, 0.0
        %v889 = vmax.f32 %v820, 0.0
        %v890 = vmax.f32 %v733, 0.0
        %v891 = vmax.f32 %v822, 0.0
        %v892 = vmax.f32 %v736, 0.0
        %v893 = vmax.f32 %v825, 0.0
        %v894 = vmax.f32 %v738, 0.0
        %v895 = vmax.f32 %v827, 0.0
        %v896 = vmax.f32 %v741, 0.0
        %v897 = vmax.f32 %v830, 0.0
        %v898 = vmax.f32 %v743, 0.0
        %v899 = vmax.f32 %v832, 0.0
        %v900 = vmax.f32 %v746, 0.0
        %v901 = vmax.f32 %v835, 0.0
        %v902 = vmax.f32 %v748, 0.0
        %v903 = vmax.f32 %v837, 0.0
        %v904 = vmax.f32 %v751, 0.0
        %v905 = vmax.f32 %v840, 0.0
        %v906 = vmax.f32 %v753, 0.0
        %v907 = vmax.f32 %v842, 0.0
        %v908 = vpack.c.bf16 %v846, %v844
        %v909 = vpack.c.bf16 %v847, %v845
        %v910 = vpack.c.bf16 %v850, %v848
        %v911 = vpack.c.bf16 %v851, %v849
        %v912 = vpack.c.bf16 %v854, %v852
        %v913 = vpack.c.bf16 %v855, %v853
        %v914 = vpack.c.bf16 %v858, %v856
        %v915 = vpack.c.bf16 %v859, %v857
        %v916 = vpack.c.bf16 %v862, %v860
        %v917 = vpack.c.bf16 %v863, %v861
        %v918 = vpack.c.bf16 %v866, %v864
        %v919 = vpack.c.bf16 %v867, %v865
        %v920 = vpack.c.bf16 %v870, %v868
        %v921 = vpack.c.bf16 %v871, %v869
        %v922 = vpack.c.bf16 %v874, %v872
        %v923 = vpack.c.bf16 %v875, %v873
        %v924 = vpack.c.bf16 %v878, %v876
        %v925 = vpack.c.bf16 %v879, %v877
        %v926 = vpack.c.bf16 %v882, %v880
        %v927 = vpack.c.bf16 %v883, %v881
        %v928 = vpack.c.bf16 %v886, %v884
        %v929 = vpack.c.bf16 %v887, %v885
        %v930 = vpack.c.bf16 %v890, %v888
        %v931 = vpack.c.bf16 %v891, %v889
        %v932 = vpack.c.bf16 %v894, %v892
        %v933 = vpack.c.bf16 %v895, %v893
        %v934 = vpack.c.bf16 %v898, %v896
        %v935 = vpack.c.bf16 %v899, %v897
        %v936 = vpack.c.bf16 %v902, %v900
        %v937 = vpack.c.bf16 %v903, %v901
        %v938 = vpack.c.bf16 %v906, %v904
        %v939 = vpack.c.bf16 %v907, %v905
        %v940 = vld [vmem:[#allocation8] sm:$0xff]
        %v941 = vld [vmem:[#allocation8 + $0x8] sm:$0xff]
        %v942 = vld [vmem:[#allocation8 + $0x10] sm:$0xff]
        %v943 = vld [vmem:[#allocation8 + $0x18] sm:$0xff]
        %v944 = vld [vmem:[#allocation8 + $0x20] sm:$0xff]
        %v945 = vld [vmem:[#allocation8 + $0x28] sm:$0xff]
        %v946 = vld [vmem:[#allocation8 + $0x30] sm:$0xff]
        %v947 = vld [vmem:[#allocation8 + $0x38] sm:$0xff]
        %v948 = vld [vmem:[#allocation8 + $0x40] sm:$0xff]
        %v949 = vld [vmem:[#allocation8 + $0x48] sm:$0xff]
        %v950 = vld [vmem:[#allocation8 + $0x50] sm:$0xff]
        %v951 = vld [vmem:[#allocation8 + $0x58] sm:$0xff]
        %v952 = vld [vmem:[#allocation8 + $0x60] sm:$0xff]
        %v953 = vld [vmem:[#allocation8 + $0x68] sm:$0xff]
        %v954 = vld [vmem:[#allocation8 + $0x70] sm:$0xff]
        %v955 = vld [vmem:[#allocation8 + $0x78] sm:$0xff]
        %v956 = vld [vmem:[#allocation8 + $0x80] sm:$0xff]
        %v957 = vld [vmem:[#allocation8 + $0x88] sm:$0xff]
        %v958 = vld [vmem:[#allocation8 + $0x90] sm:$0xff]
        %v959 = vld [vmem:[#allocation8 + $0x98] sm:$0xff]
        %v960 = vld [vmem:[#allocation8 + $0xa0] sm:$0xff]
        %v961 = vld [vmem:[#allocation8 + $0xa8] sm:$0xff]
        %v962 = vld [vmem:[#allocation8 + $0xb0] sm:$0xff]
        %v963 = vld [vmem:[#allocation8 + $0xb8] sm:$0xff]
        %v964 = vld [vmem:[#allocation8 + $0xc0] sm:$0xff]
        %v965 = vld [vmem:[#allocation8 + $0xc8] sm:$0xff]
        %v966 = vld [vmem:[#allocation8 + $0xd0] sm:$0xff]
        %v967 = vld [vmem:[#allocation8 + $0xd8] sm:$0xff]
        %v968 = vld [vmem:[#allocation8 + $0xe0] sm:$0xff]
        %v969 = vld [vmem:[#allocation8 + $0xe8] sm:$0xff]
        %v970 = vld [vmem:[#allocation8 + $0xf0] sm:$0xff]
        %v971 = vld [vmem:[#allocation8 + $0xf8] sm:$0xff]
        %v972 = vld [vmem:[%s4] sm:$0x3]
        %v974 = vperm.slane %v972, 0
        %v975 = vperm.slane %v972, 1
        %v1010 = vunpack.c.l.b16 %v940
        %v1011 = vunpack.c.h.b16 %v940
        %v1012 = vunpack.c.l.b16 %v941
        %v1013 = vunpack.c.h.b16 %v941
        %v1014 = vunpack.c.l.b16 %v942
        %v1015 = vunpack.c.h.b16 %v942
        %v1016 = vunpack.c.l.b16 %v943
        %v1017 = vunpack.c.h.b16 %v943
        %v1018 = vunpack.c.l.b16 %v944
        %v1019 = vunpack.c.h.b16 %v944
        %v1020 = vunpack.c.l.b16 %v945
        %v1021 = vunpack.c.h.b16 %v945
        %v1022 = vunpack.c.l.b16 %v946
        %v1023 = vunpack.c.h.b16 %v946
        %v1024 = vunpack.c.l.b16 %v947
        %v1025 = vunpack.c.h.b16 %v947
        %v1026 = vunpack.c.l.b16 %v948
        %v1027 = vunpack.c.h.b16 %v948
        %v1028 = vunpack.c.l.b16 %v949
        %v1029 = vunpack.c.h.b16 %v949
        %v1030 = vunpack.c.l.b16 %v950
        %v1031 = vunpack.c.h.b16 %v950
        %v1032 = vunpack.c.l.b16 %v951
        %v1033 = vunpack.c.h.b16 %v951
        %v1034 = vunpack.c.l.b16 %v952
        %v1035 = vunpack.c.h.b16 %v952
        %v1036 = vunpack.c.l.b16 %v953
        %v1037 = vunpack.c.h.b16 %v953
        %v1038 = vunpack.c.l.b16 %v954
        %v1039 = vunpack.c.h.b16 %v954
        %v1040 = vunpack.c.l.b16 %v955
        %v1041 = vunpack.c.h.b16 %v955
        %v1042 = vunpack.c.l.b16 %v956
        %v1043 = vunpack.c.h.b16 %v956
        %v1044 = vunpack.c.l.b16 %v957
        %v1045 = vunpack.c.h.b16 %v957
        %v1046 = vunpack.c.l.b16 %v958
        %v1047 = vunpack.c.h.b16 %v958
        %v1048 = vunpack.c.l.b16 %v959
        %v1049 = vunpack.c.h.b16 %v959
        %v1050 = vunpack.c.l.b16 %v960
        %v1051 = vunpack.c.h.b16 %v960
        %v1052 = vunpack.c.l.b16 %v961
        %v1053 = vunpack.c.h.b16 %v961
        %v1054 = vunpack.c.l.b16 %v962
        %v1055 = vunpack.c.h.b16 %v962
        %v1056 = vunpack.c.l.b16 %v963
        %v1057 = vunpack.c.h.b16 %v963
        %v1058 = vunpack.c.l.b16 %v964
        %v1059 = vunpack.c.h.b16 %v964
        %v1060 = vunpack.c.l.b16 %v965
        %v1061 = vunpack.c.h.b16 %v965
        %v1062 = vunpack.c.l.b16 %v966
        %v1063 = vunpack.c.h.b16 %v966
        %v1064 = vunpack.c.l.b16 %v967
        %v1065 = vunpack.c.h.b16 %v967
        %v1066 = vunpack.c.l.b16 %v968
        %v1067 = vunpack.c.h.b16 %v968
        %v1068 = vunpack.c.l.b16 %v969
        %v1069 = vunpack.c.h.b16 %v969
        %v1070 = vunpack.c.l.b16 %v970
        %v1071 = vunpack.c.h.b16 %v970
        %v1072 = vunpack.c.l.b16 %v971
        %v1073 = vunpack.c.h.b16 %v971
        %v1074 = vpack.c.b16 %v1012, %v1010
        %v1075 = vpack.c.b16 %v1013, %v1011
        %v1076 = vpack.c.b16 %v1016, %v1014
        %v1077 = vpack.c.b16 %v1017, %v1015
        %v1078 = vpack.c.b16 %v1020, %v1018
        %v1079 = vpack.c.b16 %v1021, %v1019
        %v1080 = vpack.c.b16 %v1024, %v1022
        %v1081 = vpack.c.b16 %v1025, %v1023
        %v1082 = vpack.c.b16 %v1028, %v1026
        %v1083 = vpack.c.b16 %v1029, %v1027
        %v1084 = vpack.c.b16 %v1032, %v1030
        %v1085 = vpack.c.b16 %v1033, %v1031
        %v1086 = vpack.c.b16 %v1036, %v1034
        %v1087 = vpack.c.b16 %v1037, %v1035
        %v1088 = vpack.c.b16 %v1040, %v1038
        %v1089 = vpack.c.b16 %v1041, %v1039
        %v1090 = vpack.c.b16 %v1044, %v1042
        %v1091 = vpack.c.b16 %v1045, %v1043
        %v1092 = vpack.c.b16 %v1048, %v1046
        %v1093 = vpack.c.b16 %v1049, %v1047
        %v1094 = vpack.c.b16 %v1052, %v1050
        %v1095 = vpack.c.b16 %v1053, %v1051
        %v1096 = vpack.c.b16 %v1056, %v1054
        %v1097 = vpack.c.b16 %v1057, %v1055
        %v1098 = vpack.c.b16 %v1060, %v1058
        %v1099 = vpack.c.b16 %v1061, %v1059
        %v1100 = vpack.c.b16 %v1064, %v1062
        %v1101 = vpack.c.b16 %v1065, %v1063
        %v1102 = vpack.c.b16 %v1068, %v1066
        %v1103 = vpack.c.b16 %v1069, %v1067
        %v1104 = vpack.c.b16 %v1072, %v1070
        %v1105 = vpack.c.b16 %v1073, %v1071
        %1138 = vmatpush.bf16.msra.mxu0 %v1088
        %1139 = vmatpush.bf16.msra.mxu0 %v1086
        %1140 = vmatpush.bf16.msra.mxu0 %v1084
        %1141 = vmatpush.bf16.msra.mxu0 %v1082
        %1142 = vmatpush.bf16.msra.mxu0 %v1080
        %1143 = vmatpush.bf16.msra.mxu0 %v1078
        %1144 = vmatpush.bf16.msra.mxu0 %v1076
        %1145 = vmatpush.bf16.msra.mxu0 %v1074
        %1146 = vmatmul.bf16.gmra.mxu0 %v908
        %v1147 = vpop.f32.mrf.mxu0
        %v1148 = vadd.f32 %v974, %v1147
        %v1149 = vpop.f32.mrf.mxu0
        %v1150 = vadd.f32 %v974, %v1149
        %1151 = vmatmul.bf16.gmra.mxu0 %v910
        %v1152 = vpop.f32.mrf.mxu0
        %v1153 = vadd.f32 %v974, %v1152
        %v1154 = vpop.f32.mrf.mxu0
        %v1155 = vadd.f32 %v974, %v1154
        %1156 = vmatmul.bf16.gmra.mxu0 %v912
        %v1157 = vpop.f32.mrf.mxu0
        %v1158 = vadd.f32 %v974, %v1157
        %v1159 = vpop.f32.mrf.mxu0
        %v1160 = vadd.f32 %v974, %v1159
        %1161 = vmatmul.bf16.gmra.mxu0 %v914
        %v1162 = vpop.f32.mrf.mxu0
        %v1163 = vadd.f32 %v974, %v1162
        %v1164 = vpop.f32.mrf.mxu0
        %v1165 = vadd.f32 %v974, %v1164
        %1166 = vmatmul.bf16.gmra.mxu0 %v916
        %v1167 = vpop.f32.mrf.mxu0
        %v1168 = vadd.f32 %v974, %v1167
        %v1169 = vpop.f32.mrf.mxu0
        %v1170 = vadd.f32 %v974, %v1169
        %1171 = vmatmul.bf16.gmra.mxu0 %v918
        %v1172 = vpop.f32.mrf.mxu0
        %v1173 = vadd.f32 %v974, %v1172
        %v1174 = vpop.f32.mrf.mxu0
        %v1175 = vadd.f32 %v974, %v1174
        %1176 = vmatmul.bf16.gmra.mxu0 %v920
        %v1177 = vpop.f32.mrf.mxu0
        %v1178 = vadd.f32 %v974, %v1177
        %v1179 = vpop.f32.mrf.mxu0
        %v1180 = vadd.f32 %v974, %v1179
        %1181 = vmatmul.bf16.gmra.mxu0 %v922
        %v1182 = vpop.f32.mrf.mxu0
        %v1183 = vadd.f32 %v974, %v1182
        %v1184 = vpop.f32.mrf.mxu0
        %v1185 = vadd.f32 %v974, %v1184
        %1186 = vmatmul.bf16.gmra.mxu0 %v924
        %v1187 = vpop.f32.mrf.mxu0
        %v1188 = vadd.f32 %v974, %v1187
        %v1189 = vpop.f32.mrf.mxu0
        %v1190 = vadd.f32 %v974, %v1189
        %1191 = vmatmul.bf16.gmra.mxu0 %v926
        %v1192 = vpop.f32.mrf.mxu0
        %v1193 = vadd.f32 %v974, %v1192
        %v1194 = vpop.f32.mrf.mxu0
        %v1195 = vadd.f32 %v974, %v1194
        %1196 = vmatmul.bf16.gmra.mxu0 %v928
        %v1197 = vpop.f32.mrf.mxu0
        %v1198 = vadd.f32 %v974, %v1197
        %v1199 = vpop.f32.mrf.mxu0
        %v1200 = vadd.f32 %v974, %v1199
        %1201 = vmatmul.bf16.gmra.mxu0 %v930
        %v1202 = vpop.f32.mrf.mxu0
        %v1203 = vadd.f32 %v974, %v1202
        %v1204 = vpop.f32.mrf.mxu0
        %v1205 = vadd.f32 %v974, %v1204
        %1206 = vmatmul.bf16.gmra.mxu0 %v932
        %v1207 = vpop.f32.mrf.mxu0
        %v1208 = vadd.f32 %v974, %v1207
        %v1209 = vpop.f32.mrf.mxu0
        %v1210 = vadd.f32 %v974, %v1209
        %1211 = vmatmul.bf16.gmra.mxu0 %v934
        %v1212 = vpop.f32.mrf.mxu0
        %v1213 = vadd.f32 %v974, %v1212
        %v1214 = vpop.f32.mrf.mxu0
        %v1215 = vadd.f32 %v974, %v1214
        %1216 = vmatmul.bf16.gmra.mxu0 %v936
        %v1217 = vpop.f32.mrf.mxu0
        %v1218 = vadd.f32 %v974, %v1217
        %v1219 = vpop.f32.mrf.mxu0
        %v1220 = vadd.f32 %v974, %v1219
        %1221 = vmatmul.bf16.gmra.mxu0 %v938
        %v1222 = vpop.f32.mrf.mxu0
        %v1223 = vadd.f32 %v974, %v1222
        %v1224 = vpop.f32.mrf.mxu0
        %v1225 = vadd.f32 %v974, %v1224
        %1226 = vdwg.mxu0
        %1227 = vmatpush.bf16.msra.mxu0 %v1104
        %1228 = vmatpush.bf16.msra.mxu0 %v1102
        %1229 = vmatpush.bf16.msra.mxu0 %v1100
        %1230 = vmatpush.bf16.msra.mxu0 %v1098
        %1231 = vmatpush.bf16.msra.mxu0 %v1096
        %1232 = vmatpush.bf16.msra.mxu0 %v1094
        %1233 = vmatpush.bf16.msra.mxu0 %v1092
        %1234 = vmatpush.bf16.msra.mxu0 %v1090
        %1235 = vmatmul.bf16.gmra.mxu0 %v909
        %v1236 = vpop.f32.mrf.mxu0
        %v1237 = vadd.f32 %v1148, %v1236
        %v1238 = vpop.f32.mrf.mxu0
        %v1239 = vadd.f32 %v1150, %v1238
        %1240 = vmatmul.bf16.gmra.mxu0 %v911
        %v1241 = vpop.f32.mrf.mxu0
        %v1242 = vadd.f32 %v1153, %v1241
        %v1243 = vpop.f32.mrf.mxu0
        %v1244 = vadd.f32 %v1155, %v1243
        %1245 = vmatmul.bf16.gmra.mxu0 %v913
        %v1246 = vpop.f32.mrf.mxu0
        %v1247 = vadd.f32 %v1158, %v1246
        %v1248 = vpop.f32.mrf.mxu0
        %v1249 = vadd.f32 %v1160, %v1248
        %1250 = vmatmul.bf16.gmra.mxu0 %v915
        %v1251 = vpop.f32.mrf.mxu0
        %v1252 = vadd.f32 %v1163, %v1251
        %v1253 = vpop.f32.mrf.mxu0
        %v1254 = vadd.f32 %v1165, %v1253
        %1255 = vmatmul.bf16.gmra.mxu0 %v917
        %v1256 = vpop.f32.mrf.mxu0
        %v1257 = vadd.f32 %v1168, %v1256
        %v1258 = vpop.f32.mrf.mxu0
        %v1259 = vadd.f32 %v1170, %v1258
        %1260 = vmatmul.bf16.gmra.mxu0 %v919
        %v1261 = vpop.f32.mrf.mxu0
        %v1262 = vadd.f32 %v1173, %v1261
        %v1263 = vpop.f32.mrf.mxu0
        %v1264 = vadd.f32 %v1175, %v1263
        %1265 = vmatmul.bf16.gmra.mxu0 %v921
        %v1266 = vpop.f32.mrf.mxu0
        %v1267 = vadd.f32 %v1178, %v1266
        %v1268 = vpop.f32.mrf.mxu0
        %v1269 = vadd.f32 %v1180, %v1268
        %1270 = vmatmul.bf16.gmra.mxu0 %v923
        %v1271 = vpop.f32.mrf.mxu0
        %v1272 = vadd.f32 %v1183, %v1271
        %v1273 = vpop.f32.mrf.mxu0
        %v1274 = vadd.f32 %v1185, %v1273
        %1275 = vmatmul.bf16.gmra.mxu0 %v925
        %v1276 = vpop.f32.mrf.mxu0
        %v1277 = vadd.f32 %v1188, %v1276
        %v1278 = vpop.f32.mrf.mxu0
        %v1279 = vadd.f32 %v1190, %v1278
        %1280 = vmatmul.bf16.gmra.mxu0 %v927
        %v1281 = vpop.f32.mrf.mxu0
        %v1282 = vadd.f32 %v1193, %v1281
        %v1283 = vpop.f32.mrf.mxu0
        %v1284 = vadd.f32 %v1195, %v1283
        %1285 = vmatmul.bf16.gmra.mxu0 %v929
        %v1286 = vpop.f32.mrf.mxu0
        %v1287 = vadd.f32 %v1198, %v1286
        %v1288 = vpop.f32.mrf.mxu0
        %v1289 = vadd.f32 %v1200, %v1288
        %1290 = vmatmul.bf16.gmra.mxu0 %v931
        %v1291 = vpop.f32.mrf.mxu0
        %v1292 = vadd.f32 %v1203, %v1291
        %v1293 = vpop.f32.mrf.mxu0
        %v1294 = vadd.f32 %v1205, %v1293
        %1295 = vmatmul.bf16.gmra.mxu0 %v933
        %v1296 = vpop.f32.mrf.mxu0
        %v1297 = vadd.f32 %v1208, %v1296
        %v1298 = vpop.f32.mrf.mxu0
        %v1299 = vadd.f32 %v1210, %v1298
        %1300 = vmatmul.bf16.gmra.mxu0 %v935
        %v1301 = vpop.f32.mrf.mxu0
        %v1302 = vadd.f32 %v1213, %v1301
        %v1303 = vpop.f32.mrf.mxu0
        %v1304 = vadd.f32 %v1215, %v1303
        %1305 = vmatmul.bf16.gmra.mxu0 %v937
        %v1306 = vpop.f32.mrf.mxu0
        %v1307 = vadd.f32 %v1218, %v1306
        %v1308 = vpop.f32.mrf.mxu0
        %v1309 = vadd.f32 %v1220, %v1308
        %1310 = vmatmul.bf16.gmra.mxu0 %v939
        %v1311 = vpop.f32.mrf.mxu0
        %v1312 = vadd.f32 %v1223, %v1311
        %v1313 = vpop.f32.mrf.mxu0
        %v1314 = vadd.f32 %v1225, %v1313
        %1315 = vdwg.mxu0
        %1316 = vmatpush.bf16.msra.mxu0 %v1089
        %1317 = vmatpush.bf16.msra.mxu0 %v1087
        %1318 = vmatpush.bf16.msra.mxu0 %v1085
        %1319 = vmatpush.bf16.msra.mxu0 %v1083
        %1320 = vmatpush.bf16.msra.mxu0 %v1081
        %1321 = vmatpush.bf16.msra.mxu0 %v1079
        %1322 = vmatpush.bf16.msra.mxu0 %v1077
        %1323 = vmatpush.bf16.msra.mxu0 %v1075
        %1324 = vmatmul.bf16.gmra.mxu0 %v908
        %v1325 = vpop.f32.mrf.mxu0
        %v1326 = vadd.f32 %v975, %v1325
        %v1327 = vpop.f32.mrf.mxu0
        %v1328 = vadd.f32 %v975, %v1327
        %1329 = vmatmul.bf16.gmra.mxu0 %v910
        %v1330 = vpop.f32.mrf.mxu0
        %v1331 = vadd.f32 %v975, %v1330
        %v1332 = vpop.f32.mrf.mxu0
        %v1333 = vadd.f32 %v975, %v1332
        %1334 = vmatmul.bf16.gmra.mxu0 %v912
        %v1335 = vpop.f32.mrf.mxu0
        %v1336 = vadd.f32 %v975, %v1335
        %v1337 = vpop.f32.mrf.mxu0
        %v1338 = vadd.f32 %v975, %v1337
        %1339 = vmatmul.bf16.gmra.mxu0 %v914
        %v1340 = vpop.f32.mrf.mxu0
        %v1341 = vadd.f32 %v975, %v1340
        %v1342 = vpop.f32.mrf.mxu0
        %v1343 = vadd.f32 %v975, %v1342
        %1344 = vmatmul.bf16.gmra.mxu0 %v916
        %v1345 = vpop.f32.mrf.mxu0
        %v1346 = vadd.f32 %v975, %v1345
        %v1347 = vpop.f32.mrf.mxu0
        %v1348 = vadd.f32 %v975, %v1347
        %1349 = vmatmul.bf16.gmra.mxu0 %v918
        %v1350 = vpop.f32.mrf.mxu0
        %v1351 = vadd.f32 %v975, %v1350
        %v1352 = vpop.f32.mrf.mxu0
        %v1353 = vadd.f32 %v975, %v1352
        %1354 = vmatmul.bf16.gmra.mxu0 %v920
        %v1355 = vpop.f32.mrf.mxu0
        %v1356 = vadd.f32 %v975, %v1355
        %v1357 = vpop.f32.mrf.mxu0
        %v1358 = vadd.f32 %v975, %v1357
        %1359 = vmatmul.bf16.gmra.mxu0 %v922
        %v1360 = vpop.f32.mrf.mxu0
        %v1361 = vadd.f32 %v975, %v1360
        %v1362 = vpop.f32.mrf.mxu0
        %v1363 = vadd.f32 %v975, %v1362
        %1364 = vmatmul.bf16.gmra.mxu0 %v924
        %v1365 = vpop.f32.mrf.mxu0
        %v1366 = vadd.f32 %v975, %v1365
        %v1367 = vpop.f32.mrf.mxu0
        %v1368 = vadd.f32 %v975, %v1367
        %1369 = vmatmul.bf16.gmra.mxu0 %v926
        %v1370 = vpop.f32.mrf.mxu0
        %v1371 = vadd.f32 %v975, %v1370
        %v1372 = vpop.f32.mrf.mxu0
        %v1373 = vadd.f32 %v975, %v1372
        %1374 = vmatmul.bf16.gmra.mxu0 %v928
        %v1375 = vpop.f32.mrf.mxu0
        %v1376 = vadd.f32 %v975, %v1375
        %v1377 = vpop.f32.mrf.mxu0
        %v1378 = vadd.f32 %v975, %v1377
        %1379 = vmatmul.bf16.gmra.mxu0 %v930
        %v1380 = vpop.f32.mrf.mxu0
        %v1381 = vadd.f32 %v975, %v1380
        %v1382 = vpop.f32.mrf.mxu0
        %v1383 = vadd.f32 %v975, %v1382
        %1384 = vmatmul.bf16.gmra.mxu0 %v932
        %v1385 = vpop.f32.mrf.mxu0
        %v1386 = vadd.f32 %v975, %v1385
        %v1387 = vpop.f32.mrf.mxu0
        %v1388 = vadd.f32 %v975, %v1387
        %1389 = vmatmul.bf16.gmra.mxu0 %v934
        %v1390 = vpop.f32.mrf.mxu0
        %v1391 = vadd.f32 %v975, %v1390
        %v1392 = vpop.f32.mrf.mxu0
        %v1393 = vadd.f32 %v975, %v1392
        %1394 = vmatmul.bf16.gmra.mxu0 %v936
        %v1395 = vpop.f32.mrf.mxu0
        %v1396 = vadd.f32 %v975, %v1395
        %v1397 = vpop.f32.mrf.mxu0
        %v1398 = vadd.f32 %v975, %v1397
        %1399 = vmatmul.bf16.gmra.mxu0 %v938
        %v1400 = vpop.f32.mrf.mxu0
        %v1401 = vadd.f32 %v975, %v1400
        %v1402 = vpop.f32.mrf.mxu0
        %v1403 = vadd.f32 %v975, %v1402
        %1404 = vdwg.mxu0
        %1405 = vmatpush.bf16.msra.mxu0 %v1105
        %1406 = vmatpush.bf16.msra.mxu0 %v1103
        %1407 = vmatpush.bf16.msra.mxu0 %v1101
        %1408 = vmatpush.bf16.msra.mxu0 %v1099
        %1409 = vmatpush.bf16.msra.mxu0 %v1097
        %1410 = vmatpush.bf16.msra.mxu0 %v1095
        %1411 = vmatpush.bf16.msra.mxu0 %v1093
        %1412 = vmatpush.bf16.msra.mxu0 %v1091
        %1413 = vmatmul.bf16.gmra.mxu0 %v909
        %v1414 = vpop.f32.mrf.mxu0
        %v1415 = vadd.f32 %v1326, %v1414
        %v1416 = vpop.f32.mrf.mxu0
        %v1417 = vadd.f32 %v1328, %v1416
        %1418 = vmatmul.bf16.gmra.mxu0 %v911
        %v1419 = vpop.f32.mrf.mxu0
        %v1420 = vadd.f32 %v1331, %v1419
        %v1421 = vpop.f32.mrf.mxu0
        %v1422 = vadd.f32 %v1333, %v1421
        %1423 = vmatmul.bf16.gmra.mxu0 %v913
        %v1424 = vpop.f32.mrf.mxu0
        %v1425 = vadd.f32 %v1336, %v1424
        %v1426 = vpop.f32.mrf.mxu0
        %v1427 = vadd.f32 %v1338, %v1426
        %1428 = vmatmul.bf16.gmra.mxu0 %v915
        %v1429 = vpop.f32.mrf.mxu0
        %v1430 = vadd.f32 %v1341, %v1429
        %v1431 = vpop.f32.mrf.mxu0
        %v1432 = vadd.f32 %v1343, %v1431
        %1433 = vmatmul.bf16.gmra.mxu0 %v917
        %v1434 = vpop.f32.mrf.mxu0
        %v1435 = vadd.f32 %v1346, %v1434
        %v1436 = vpop.f32.mrf.mxu0
        %v1437 = vadd.f32 %v1348, %v1436
        %1438 = vmatmul.bf16.gmra.mxu0 %v919
        %v1439 = vpop.f32.mrf.mxu0
        %v1440 = vadd.f32 %v1351, %v1439
        %v1441 = vpop.f32.mrf.mxu0
        %v1442 = vadd.f32 %v1353, %v1441
        %1443 = vmatmul.bf16.gmra.mxu0 %v921
        %v1444 = vpop.f32.mrf.mxu0
        %v1445 = vadd.f32 %v1356, %v1444
        %v1446 = vpop.f32.mrf.mxu0
        %v1447 = vadd.f32 %v1358, %v1446
        %1448 = vmatmul.bf16.gmra.mxu0 %v923
        %v1449 = vpop.f32.mrf.mxu0
        %v1450 = vadd.f32 %v1361, %v1449
        %v1451 = vpop.f32.mrf.mxu0
        %v1452 = vadd.f32 %v1363, %v1451
        %1453 = vmatmul.bf16.gmra.mxu0 %v925
        %v1454 = vpop.f32.mrf.mxu0
        %v1455 = vadd.f32 %v1366, %v1454
        %v1456 = vpop.f32.mrf.mxu0
        %v1457 = vadd.f32 %v1368, %v1456
        %1458 = vmatmul.bf16.gmra.mxu0 %v927
        %v1459 = vpop.f32.mrf.mxu0
        %v1460 = vadd.f32 %v1371, %v1459
        %v1461 = vpop.f32.mrf.mxu0
        %v1462 = vadd.f32 %v1373, %v1461
        %1463 = vmatmul.bf16.gmra.mxu0 %v929
        %v1464 = vpop.f32.mrf.mxu0
        %v1465 = vadd.f32 %v1376, %v1464
        %v1466 = vpop.f32.mrf.mxu0
        %v1467 = vadd.f32 %v1378, %v1466
        %1468 = vmatmul.bf16.gmra.mxu0 %v931
        %v1469 = vpop.f32.mrf.mxu0
        %v1470 = vadd.f32 %v1381, %v1469
        %v1471 = vpop.f32.mrf.mxu0
        %v1472 = vadd.f32 %v1383, %v1471
        %1473 = vmatmul.bf16.gmra.mxu0 %v933
        %v1474 = vpop.f32.mrf.mxu0
        %v1475 = vadd.f32 %v1386, %v1474
        %v1476 = vpop.f32.mrf.mxu0
        %v1477 = vadd.f32 %v1388, %v1476
        %1478 = vmatmul.bf16.gmra.mxu0 %v935
        %v1479 = vpop.f32.mrf.mxu0
        %v1480 = vadd.f32 %v1391, %v1479
        %v1481 = vpop.f32.mrf.mxu0
        %v1482 = vadd.f32 %v1393, %v1481
        %1483 = vmatmul.bf16.gmra.mxu0 %v937
        %v1484 = vpop.f32.mrf.mxu0
        %v1485 = vadd.f32 %v1396, %v1484
        %v1486 = vpop.f32.mrf.mxu0
        %v1487 = vadd.f32 %v1398, %v1486
        %1488 = vmatmul.bf16.gmra.mxu0 %v939
        %v1489 = vpop.f32.mrf.mxu0
        %v1490 = vadd.f32 %v1401, %v1489
        %v1491 = vpop.f32.mrf.mxu0
        %v1492 = vadd.f32 %v1403, %v1491
        %1493 = vdwg.mxu0
        %v1494 = vmax.f32 %v1237, 0.0
        %v1495 = vmax.f32 %v1415, 0.0
        %v1496 = vmax.f32 %v1239, 0.0
        %v1497 = vmax.f32 %v1417, 0.0
        %v1498 = vmax.f32 %v1242, 0.0
        %v1499 = vmax.f32 %v1420, 0.0
        %v1500 = vmax.f32 %v1244, 0.0
        %v1501 = vmax.f32 %v1422, 0.0
        %v1502 = vmax.f32 %v1247, 0.0
        %v1503 = vmax.f32 %v1425, 0.0
        %v1504 = vmax.f32 %v1249, 0.0
        %v1505 = vmax.f32 %v1427, 0.0
        %v1506 = vmax.f32 %v1252, 0.0
        %v1507 = vmax.f32 %v1430, 0.0
        %v1508 = vmax.f32 %v1254, 0.0
        %v1509 = vmax.f32 %v1432, 0.0
        %v1510 = vmax.f32 %v1257, 0.0
        %v1511 = vmax.f32 %v1435, 0.0
        %v1512 = vmax.f32 %v1259, 0.0
        %v1513 = vmax.f32 %v1437, 0.0
        %v1514 = vmax.f32 %v1262, 0.0
        %v1515 = vmax.f32 %v1440, 0.0
        %v1516 = vmax.f32 %v1264, 0.0
        %v1517 = vmax.f32 %v1442, 0.0
        %v1518 = vmax.f32 %v1267, 0.0
        %v1519 = vmax.f32 %v1445, 0.0
        %v1520 = vmax.f32 %v1269, 0.0
        %v1521 = vmax.f32 %v1447, 0.0
        %v1522 = vmax.f32 %v1272, 0.0
        %v1523 = vmax.f32 %v1450, 0.0
        %v1524 = vmax.f32 %v1274, 0.0
        %v1525 = vmax.f32 %v1452, 0.0
        %v1526 = vmax.f32 %v1277, 0.0
        %v1527 = vmax.f32 %v1455, 0.0
        %v1528 = vmax.f32 %v1279, 0.0
        %v1529 = vmax.f32 %v1457, 0.0
        %v1530 = vmax.f32 %v1282, 0.0
        %v1531 = vmax.f32 %v1460, 0.0
        %v1532 = vmax.f32 %v1284, 0.0
        %v1533 = vmax.f32 %v1462, 0.0
        %v1534 = vmax.f32 %v1287, 0.0
        %v1535 = vmax.f32 %v1465, 0.0
        %v1536 = vmax.f32 %v1289, 0.0
        %v1537 = vmax.f32 %v1467, 0.0
        %v1538 = vmax.f32 %v1292, 0.0
        %v1539 = vmax.f32 %v1470, 0.0
        %v1540 = vmax.f32 %v1294, 0.0
        %v1541 = vmax.f32 %v1472, 0.0
        %v1542 = vmax.f32 %v1297, 0.0
        %v1543 = vmax.f32 %v1475, 0.0
        %v1544 = vmax.f32 %v1299, 0.0
        %v1545 = vmax.f32 %v1477, 0.0
        %v1546 = vmax.f32 %v1302, 0.0
        %v1547 = vmax.f32 %v1480, 0.0
        %v1548 = vmax.f32 %v1304, 0.0
        %v1549 = vmax.f32 %v1482, 0.0
        %v1550 = vmax.f32 %v1307, 0.0
        %v1551 = vmax.f32 %v1485, 0.0
        %v1552 = vmax.f32 %v1309, 0.0
        %v1553 = vmax.f32 %v1487, 0.0
        %v1554 = vmax.f32 %v1312, 0.0
        %v1555 = vmax.f32 %v1490, 0.0
        %v1556 = vmax.f32 %v1314, 0.0
        %v1557 = vmax.f32 %v1492, 0.0
        %v1558 = vpack.c.bf16 %v1496, %v1494
        %v1559 = vpack.c.bf16 %v1497, %v1495
        %v1560 = vpack.c.bf16 %v1500, %v1498
        %v1561 = vpack.c.bf16 %v1501, %v1499
        %v1562 = vpack.c.bf16 %v1504, %v1502
        %v1563 = vpack.c.bf16 %v1505, %v1503
        %v1564 = vpack.c.bf16 %v1508, %v1506
        %v1565 = vpack.c.bf16 %v1509, %v1507
        %v1566 = vpack.c.bf16 %v1512, %v1510
        %v1567 = vpack.c.bf16 %v1513, %v1511
        %v1568 = vpack.c.bf16 %v1516, %v1514
        %v1569 = vpack.c.bf16 %v1517, %v1515
        %v1570 = vpack.c.bf16 %v1520, %v1518
        %v1571 = vpack.c.bf16 %v1521, %v1519
        %v1572 = vpack.c.bf16 %v1524, %v1522
        %v1573 = vpack.c.bf16 %v1525, %v1523
        %v1574 = vpack.c.bf16 %v1528, %v1526
        %v1575 = vpack.c.bf16 %v1529, %v1527
        %v1576 = vpack.c.bf16 %v1532, %v1530
        %v1577 = vpack.c.bf16 %v1533, %v1531
        %v1578 = vpack.c.bf16 %v1536, %v1534
        %v1579 = vpack.c.bf16 %v1537, %v1535
        %v1580 = vpack.c.bf16 %v1540, %v1538
        %v1581 = vpack.c.bf16 %v1541, %v1539
        %v1582 = vpack.c.bf16 %v1544, %v1542
        %v1583 = vpack.c.bf16 %v1545, %v1543
        %v1584 = vpack.c.bf16 %v1548, %v1546
        %v1585 = vpack.c.bf16 %v1549, %v1547
        %v1586 = vpack.c.bf16 %v1552, %v1550
        %v1587 = vpack.c.bf16 %v1553, %v1551
        %v1588 = vpack.c.bf16 %v1556, %v1554
        %v1589 = vpack.c.bf16 %v1557, %v1555
        %v1590 = vld [vmem:[#allocation10] sm:$0xff]
        %v1591 = vld [vmem:[#allocation10 + $0x8] sm:$0xff]
        %v1592 = vld [vmem:[#allocation10 + $0x10] sm:$0xff]
        %v1593 = vld [vmem:[#allocation10 + $0x18] sm:$0xff]
        %v1594 = vld [vmem:[#allocation10 + $0x20] sm:$0xff]
        %v1595 = vld [vmem:[#allocation10 + $0x28] sm:$0xff]
        %v1596 = vld [vmem:[#allocation10 + $0x30] sm:$0xff]
        %v1597 = vld [vmem:[#allocation10 + $0x38] sm:$0xff]
        %v1598 = vld [vmem:[#allocation10 + $0x40] sm:$0xff]
        %v1599 = vld [vmem:[#allocation10 + $0x48] sm:$0xff]
        %v1600 = vld [vmem:[#allocation10 + $0x50] sm:$0xff]
        %v1601 = vld [vmem:[#allocation10 + $0x58] sm:$0xff]
        %v1602 = vld [vmem:[#allocation10 + $0x60] sm:$0xff]
        %v1603 = vld [vmem:[#allocation10 + $0x68] sm:$0xff]
        %v1604 = vld [vmem:[#allocation10 + $0x70] sm:$0xff]
        %v1605 = vld [vmem:[#allocation10 + $0x78] sm:$0xff]
        %v1606 = vld [vmem:[#allocation10 + $0x80] sm:$0xff]
        %v1607 = vld [vmem:[#allocation10 + $0x88] sm:$0xff]
        %v1608 = vld [vmem:[#allocation10 + $0x90] sm:$0xff]
        %v1609 = vld [vmem:[#allocation10 + $0x98] sm:$0xff]
        %v1610 = vld [vmem:[#allocation10 + $0xa0] sm:$0xff]
        %v1611 = vld [vmem:[#allocation10 + $0xa8] sm:$0xff]
        %v1612 = vld [vmem:[#allocation10 + $0xb0] sm:$0xff]
        %v1613 = vld [vmem:[#allocation10 + $0xb8] sm:$0xff]
        %v1614 = vld [vmem:[#allocation10 + $0xc0] sm:$0xff]
        %v1615 = vld [vmem:[#allocation10 + $0xc8] sm:$0xff]
        %v1616 = vld [vmem:[#allocation10 + $0xd0] sm:$0xff]
        %v1617 = vld [vmem:[#allocation10 + $0xd8] sm:$0xff]
        %v1618 = vld [vmem:[#allocation10 + $0xe0] sm:$0xff]
        %v1619 = vld [vmem:[#allocation10 + $0xe8] sm:$0xff]
        %v1620 = vld [vmem:[#allocation10 + $0xf0] sm:$0xff]
        %v1621 = vld [vmem:[#allocation10 + $0xf8] sm:$0xff]
        %v1622 = vld [vmem:[%s6] sm:$0x3]
        %v1624 = vperm.slane %v1622, 0
        %v1625 = vperm.slane %v1622, 1
        %v1660 = vunpack.c.l.b16 %v1590
        %v1661 = vunpack.c.h.b16 %v1590
        %v1662 = vunpack.c.l.b16 %v1591
        %v1663 = vunpack.c.h.b16 %v1591
        %v1664 = vunpack.c.l.b16 %v1592
        %v1665 = vunpack.c.h.b16 %v1592
        %v1666 = vunpack.c.l.b16 %v1593
        %v1667 = vunpack.c.h.b16 %v1593
        %v1668 = vunpack.c.l.b16 %v1594
        %v1669 = vunpack.c.h.b16 %v1594
        %v1670 = vunpack.c.l.b16 %v1595
        %v1671 = vunpack.c.h.b16 %v1595
        %v1672 = vunpack.c.l.b16 %v1596
        %v1673 = vunpack.c.h.b16 %v1596
        %v1674 = vunpack.c.l.b16 %v1597
        %v1675 = vunpack.c.h.b16 %v1597
        %v1676 = vunpack.c.l.b16 %v1598
        %v1677 = vunpack.c.h.b16 %v1598
        %v1678 = vunpack.c.l.b16 %v1599
        %v1679 = vunpack.c.h.b16 %v1599
        %v1680 = vunpack.c.l.b16 %v1600
        %v1681 = vunpack.c.h.b16 %v1600
        %v1682 = vunpack.c.l.b16 %v1601
        %v1683 = vunpack.c.h.b16 %v1601
        %v1684 = vunpack.c.l.b16 %v1602
        %v1685 = vunpack.c.h.b16 %v1602
        %v1686 = vunpack.c.l.b16 %v1603
        %v1687 = vunpack.c.h.b16 %v1603
        %v1688 = vunpack.c.l.b16 %v1604
        %v1689 = vunpack.c.h.b16 %v1604
        %v1690 = vunpack.c.l.b16 %v1605
        %v1691 = vunpack.c.h.b16 %v1605
        %v1692 = vunpack.c.l.b16 %v1606
        %v1693 = vunpack.c.h.b16 %v1606
        %v1694 = vunpack.c.l.b16 %v1607
        %v1695 = vunpack.c.h.b16 %v1607
        %v1696 = vunpack.c.l.b16 %v1608
        %v1697 = vunpack.c.h.b16 %v1608
        %v1698 = vunpack.c.l.b16 %v1609
        %v1699 = vunpack.c.h.b16 %v1609
        %v1700 = vunpack.c.l.b16 %v1610
        %v1701 = vunpack.c.h.b16 %v1610
        %v1702 = vunpack.c.l.b16 %v1611
        %v1703 = vunpack.c.h.b16 %v1611
        %v1704 = vunpack.c.l.b16 %v1612
        %v1705 = vunpack.c.h.b16 %v1612
        %v1706 = vunpack.c.l.b16 %v1613
        %v1707 = vunpack.c.h.b16 %v1613
        %v1708 = vunpack.c.l.b16 %v1614
        %v1709 = vunpack.c.h.b16 %v1614
        %v1710 = vunpack.c.l.b16 %v1615
        %v1711 = vunpack.c.h.b16 %v1615
        %v1712 = vunpack.c.l.b16 %v1616
        %v1713 = vunpack.c.h.b16 %v1616
        %v1714 = vunpack.c.l.b16 %v1617
        %v1715 = vunpack.c.h.b16 %v1617
        %v1716 = vunpack.c.l.b16 %v1618
        %v1717 = vunpack.c.h.b16 %v1618
        %v1718 = vunpack.c.l.b16 %v1619
        %v1719 = vunpack.c.h.b16 %v1619
        %v1720 = vunpack.c.l.b16 %v1620
        %v1721 = vunpack.c.h.b16 %v1620
        %v1722 = vunpack.c.l.b16 %v1621
        %v1723 = vunpack.c.h.b16 %v1621
        %v1724 = vpack.c.b16 %v1662, %v1660
        %v1725 = vpack.c.b16 %v1663, %v1661
        %v1726 = vpack.c.b16 %v1666, %v1664
        %v1727 = vpack.c.b16 %v1667, %v1665
        %v1728 = vpack.c.b16 %v1670, %v1668
        %v1729 = vpack.c.b16 %v1671, %v1669
        %v1730 = vpack.c.b16 %v1674, %v1672
        %v1731 = vpack.c.b16 %v1675, %v1673
        %v1732 = vpack.c.b16 %v1678, %v1676
        %v1733 = vpack.c.b16 %v1679, %v1677
        %v1734 = vpack.c.b16 %v1682, %v1680
        %v1735 = vpack.c.b16 %v1683, %v1681
        %v1736 = vpack.c.b16 %v1686, %v1684
        %v1737 = vpack.c.b16 %v1687, %v1685
        %v1738 = vpack.c.b16 %v1690, %v1688
        %v1739 = vpack.c.b16 %v1691, %v1689
        %v1740 = vpack.c.b16 %v1694, %v1692
        %v1741 = vpack.c.b16 %v1695, %v1693
        %v1742 = vpack.c.b16 %v1698, %v1696
        %v1743 = vpack.c.b16 %v1699, %v1697
        %v1744 = vpack.c.b16 %v1702, %v1700
        %v1745 = vpack.c.b16 %v1703, %v1701
        %v1746 = vpack.c.b16 %v1706, %v1704
        %v1747 = vpack.c.b16 %v1707, %v1705
        %v1748 = vpack.c.b16 %v1710, %v1708
        %v1749 = vpack.c.b16 %v1711, %v1709
        %v1750 = vpack.c.b16 %v1714, %v1712
        %v1751 = vpack.c.b16 %v1715, %v1713
        %v1752 = vpack.c.b16 %v1718, %v1716
        %v1753 = vpack.c.b16 %v1719, %v1717
        %v1754 = vpack.c.b16 %v1722, %v1720
        %v1755 = vpack.c.b16 %v1723, %v1721
        %1788 = vmatpush.bf16.msra.mxu0 %v1738
        %1789 = vmatpush.bf16.msra.mxu0 %v1736
        %1790 = vmatpush.bf16.msra.mxu0 %v1734
        %1791 = vmatpush.bf16.msra.mxu0 %v1732
        %1792 = vmatpush.bf16.msra.mxu0 %v1730
        %1793 = vmatpush.bf16.msra.mxu0 %v1728
        %1794 = vmatpush.bf16.msra.mxu0 %v1726
        %1795 = vmatpush.bf16.msra.mxu0 %v1724
        %1796 = vmatmul.bf16.gmra.mxu0 %v1558
        %v1797 = vpop.f32.mrf.mxu0
        %v1798 = vadd.f32 %v1624, %v1797
        %v1799 = vpop.f32.mrf.mxu0
        %v1800 = vadd.f32 %v1624, %v1799
        %1801 = vmatmul.bf16.gmra.mxu0 %v1560
        %v1802 = vpop.f32.mrf.mxu0
        %v1803 = vadd.f32 %v1624, %v1802
        %v1804 = vpop.f32.mrf.mxu0
        %v1805 = vadd.f32 %v1624, %v1804
        %1806 = vmatmul.bf16.gmra.mxu0 %v1562
        %v1807 = vpop.f32.mrf.mxu0
        %v1808 = vadd.f32 %v1624, %v1807
        %v1809 = vpop.f32.mrf.mxu0
        %v1810 = vadd.f32 %v1624, %v1809
        %1811 = vmatmul.bf16.gmra.mxu0 %v1564
        %v1812 = vpop.f32.mrf.mxu0
        %v1813 = vadd.f32 %v1624, %v1812
        %v1814 = vpop.f32.mrf.mxu0
        %v1815 = vadd.f32 %v1624, %v1814
        %1816 = vmatmul.bf16.gmra.mxu0 %v1566
        %v1817 = vpop.f32.mrf.mxu0
        %v1818 = vadd.f32 %v1624, %v1817
        %v1819 = vpop.f32.mrf.mxu0
        %v1820 = vadd.f32 %v1624, %v1819
        %1821 = vmatmul.bf16.gmra.mxu0 %v1568
        %v1822 = vpop.f32.mrf.mxu0
        %v1823 = vadd.f32 %v1624, %v1822
        %v1824 = vpop.f32.mrf.mxu0
        %v1825 = vadd.f32 %v1624, %v1824
        %1826 = vmatmul.bf16.gmra.mxu0 %v1570
        %v1827 = vpop.f32.mrf.mxu0
        %v1828 = vadd.f32 %v1624, %v1827
        %v1829 = vpop.f32.mrf.mxu0
        %v1830 = vadd.f32 %v1624, %v1829
        %1831 = vmatmul.bf16.gmra.mxu0 %v1572
        %v1832 = vpop.f32.mrf.mxu0
        %v1833 = vadd.f32 %v1624, %v1832
        %v1834 = vpop.f32.mrf.mxu0
        %v1835 = vadd.f32 %v1624, %v1834
        %1836 = vmatmul.bf16.gmra.mxu0 %v1574
        %v1837 = vpop.f32.mrf.mxu0
        %v1838 = vadd.f32 %v1624, %v1837
        %v1839 = vpop.f32.mrf.mxu0
        %v1840 = vadd.f32 %v1624, %v1839
        %1841 = vmatmul.bf16.gmra.mxu0 %v1576
        %v1842 = vpop.f32.mrf.mxu0
        %v1843 = vadd.f32 %v1624, %v1842
        %v1844 = vpop.f32.mrf.mxu0
        %v1845 = vadd.f32 %v1624, %v1844
        %1846 = vmatmul.bf16.gmra.mxu0 %v1578
        %v1847 = vpop.f32.mrf.mxu0
        %v1848 = vadd.f32 %v1624, %v1847
        %v1849 = vpop.f32.mrf.mxu0
        %v1850 = vadd.f32 %v1624, %v1849
        %1851 = vmatmul.bf16.gmra.mxu0 %v1580
        %v1852 = vpop.f32.mrf.mxu0
        %v1853 = vadd.f32 %v1624, %v1852
        %v1854 = vpop.f32.mrf.mxu0
        %v1855 = vadd.f32 %v1624, %v1854
        %1856 = vmatmul.bf16.gmra.mxu0 %v1582
        %v1857 = vpop.f32.mrf.mxu0
        %v1858 = vadd.f32 %v1624, %v1857
        %v1859 = vpop.f32.mrf.mxu0
        %v1860 = vadd.f32 %v1624, %v1859
        %1861 = vmatmul.bf16.gmra.mxu0 %v1584
        %v1862 = vpop.f32.mrf.mxu0
        %v1863 = vadd.f32 %v1624, %v1862
        %v1864 = vpop.f32.mrf.mxu0
        %v1865 = vadd.f32 %v1624, %v1864
        %1866 = vmatmul.bf16.gmra.mxu0 %v1586
        %v1867 = vpop.f32.mrf.mxu0
        %v1868 = vadd.f32 %v1624, %v1867
        %v1869 = vpop.f32.mrf.mxu0
        %v1870 = vadd.f32 %v1624, %v1869
        %1871 = vmatmul.bf16.gmra.mxu0 %v1588
        %v1872 = vpop.f32.mrf.mxu0
        %v1873 = vadd.f32 %v1624, %v1872
        %v1874 = vpop.f32.mrf.mxu0
        %v1875 = vadd.f32 %v1624, %v1874
        %1876 = vdwg.mxu0
        %1877 = vmatpush.bf16.msra.mxu0 %v1754
        %1878 = vmatpush.bf16.msra.mxu0 %v1752
        %1879 = vmatpush.bf16.msra.mxu0 %v1750
        %1880 = vmatpush.bf16.msra.mxu0 %v1748
        %1881 = vmatpush.bf16.msra.mxu0 %v1746
        %1882 = vmatpush.bf16.msra.mxu0 %v1744
        %1883 = vmatpush.bf16.msra.mxu0 %v1742
        %1884 = vmatpush.bf16.msra.mxu0 %v1740
        %1885 = vmatmul.bf16.gmra.mxu0 %v1559
        %v1886 = vpop.f32.mrf.mxu0
        %v1887 = vadd.f32 %v1798, %v1886
        %v1888 = vpop.f32.mrf.mxu0
        %v1889 = vadd.f32 %v1800, %v1888
        %1890 = vmatmul.bf16.gmra.mxu0 %v1561
        %v1891 = vpop.f32.mrf.mxu0
        %v1892 = vadd.f32 %v1803, %v1891
        %v1893 = vpop.f32.mrf.mxu0
        %v1894 = vadd.f32 %v1805, %v1893
        %1895 = vmatmul.bf16.gmra.mxu0 %v1563
        %v1896 = vpop.f32.mrf.mxu0
        %v1897 = vadd.f32 %v1808, %v1896
        %v1898 = vpop.f32.mrf.mxu0
        %v1899 = vadd.f32 %v1810, %v1898
        %1900 = vmatmul.bf16.gmra.mxu0 %v1565
        %v1901 = vpop.f32.mrf.mxu0
        %v1902 = vadd.f32 %v1813, %v1901
        %v1903 = vpop.f32.mrf.mxu0
        %v1904 = vadd.f32 %v1815, %v1903
        %1905 = vmatmul.bf16.gmra.mxu0 %v1567
        %v1906 = vpop.f32.mrf.mxu0
        %v1907 = vadd.f32 %v1818, %v1906
        %v1908 = vpop.f32.mrf.mxu0
        %v1909 = vadd.f32 %v1820, %v1908
        %1910 = vmatmul.bf16.gmra.mxu0 %v1569
        %v1911 = vpop.f32.mrf.mxu0
        %v1912 = vadd.f32 %v1823, %v1911
        %v1913 = vpop.f32.mrf.mxu0
        %v1914 = vadd.f32 %v1825, %v1913
        %1915 = vmatmul.bf16.gmra.mxu0 %v1571
        %v1916 = vpop.f32.mrf.mxu0
        %v1917 = vadd.f32 %v1828, %v1916
        %v1918 = vpop.f32.mrf.mxu0
        %v1919 = vadd.f32 %v1830, %v1918
        %1920 = vmatmul.bf16.gmra.mxu0 %v1573
        %v1921 = vpop.f32.mrf.mxu0
        %v1922 = vadd.f32 %v1833, %v1921
        %v1923 = vpop.f32.mrf.mxu0
        %v1924 = vadd.f32 %v1835, %v1923
        %1925 = vmatmul.bf16.gmra.mxu0 %v1575
        %v1926 = vpop.f32.mrf.mxu0
        %v1927 = vadd.f32 %v1838, %v1926
        %v1928 = vpop.f32.mrf.mxu0
        %v1929 = vadd.f32 %v1840, %v1928
        %1930 = vmatmul.bf16.gmra.mxu0 %v1577
        %v1931 = vpop.f32.mrf.mxu0
        %v1932 = vadd.f32 %v1843, %v1931
        %v1933 = vpop.f32.mrf.mxu0
        %v1934 = vadd.f32 %v1845, %v1933
        %1935 = vmatmul.bf16.gmra.mxu0 %v1579
        %v1936 = vpop.f32.mrf.mxu0
        %v1937 = vadd.f32 %v1848, %v1936
        %v1938 = vpop.f32.mrf.mxu0
        %v1939 = vadd.f32 %v1850, %v1938
        %1940 = vmatmul.bf16.gmra.mxu0 %v1581
        %v1941 = vpop.f32.mrf.mxu0
        %v1942 = vadd.f32 %v1853, %v1941
        %v1943 = vpop.f32.mrf.mxu0
        %v1944 = vadd.f32 %v1855, %v1943
        %1945 = vmatmul.bf16.gmra.mxu0 %v1583
        %v1946 = vpop.f32.mrf.mxu0
        %v1947 = vadd.f32 %v1858, %v1946
        %v1948 = vpop.f32.mrf.mxu0
        %v1949 = vadd.f32 %v1860, %v1948
        %1950 = vmatmul.bf16.gmra.mxu0 %v1585
        %v1951 = vpop.f32.mrf.mxu0
        %v1952 = vadd.f32 %v1863, %v1951
        %v1953 = vpop.f32.mrf.mxu0
        %v1954 = vadd.f32 %v1865, %v1953
        %1955 = vmatmul.bf16.gmra.mxu0 %v1587
        %v1956 = vpop.f32.mrf.mxu0
        %v1957 = vadd.f32 %v1868, %v1956
        %v1958 = vpop.f32.mrf.mxu0
        %v1959 = vadd.f32 %v1870, %v1958
        %1960 = vmatmul.bf16.gmra.mxu0 %v1589
        %v1961 = vpop.f32.mrf.mxu0
        %v1962 = vadd.f32 %v1873, %v1961
        %v1963 = vpop.f32.mrf.mxu0
        %v1964 = vadd.f32 %v1875, %v1963
        %1965 = vdwg.mxu0
        %1966 = vmatpush.bf16.msra.mxu0 %v1739
        %1967 = vmatpush.bf16.msra.mxu0 %v1737
        %1968 = vmatpush.bf16.msra.mxu0 %v1735
        %1969 = vmatpush.bf16.msra.mxu0 %v1733
        %1970 = vmatpush.bf16.msra.mxu0 %v1731
        %1971 = vmatpush.bf16.msra.mxu0 %v1729
        %1972 = vmatpush.bf16.msra.mxu0 %v1727
        %1973 = vmatpush.bf16.msra.mxu0 %v1725
        %1974 = vmatmul.bf16.gmra.mxu0 %v1558
        %v1975 = vpop.f32.mrf.mxu0
        %v1976 = vadd.f32 %v1625, %v1975
        %v1977 = vpop.f32.mrf.mxu0
        %v1978 = vadd.f32 %v1625, %v1977
        %1979 = vmatmul.bf16.gmra.mxu0 %v1560
        %v1980 = vpop.f32.mrf.mxu0
        %v1981 = vadd.f32 %v1625, %v1980
        %v1982 = vpop.f32.mrf.mxu0
        %v1983 = vadd.f32 %v1625, %v1982
        %1984 = vmatmul.bf16.gmra.mxu0 %v1562
        %v1985 = vpop.f32.mrf.mxu0
        %v1986 = vadd.f32 %v1625, %v1985
        %v1987 = vpop.f32.mrf.mxu0
        %v1988 = vadd.f32 %v1625, %v1987
        %1989 = vmatmul.bf16.gmra.mxu0 %v1564
        %v1990 = vpop.f32.mrf.mxu0
        %v1991 = vadd.f32 %v1625, %v1990
        %v1992 = vpop.f32.mrf.mxu0
        %v1993 = vadd.f32 %v1625, %v1992
        %1994 = vmatmul.bf16.gmra.mxu0 %v1566
        %v1995 = vpop.f32.mrf.mxu0
        %v1996 = vadd.f32 %v1625, %v1995
        %v1997 = vpop.f32.mrf.mxu0
        %v1998 = vadd.f32 %v1625, %v1997
        %1999 = vmatmul.bf16.gmra.mxu0 %v1568
        %v2000 = vpop.f32.mrf.mxu0
        %v2001 = vadd.f32 %v1625, %v2000
        %v2002 = vpop.f32.mrf.mxu0
        %v2003 = vadd.f32 %v1625, %v2002
        %2004 = vmatmul.bf16.gmra.mxu0 %v1570
        %v2005 = vpop.f32.mrf.mxu0
        %v2006 = vadd.f32 %v1625, %v2005
        %v2007 = vpop.f32.mrf.mxu0
        %v2008 = vadd.f32 %v1625, %v2007
        %2009 = vmatmul.bf16.gmra.mxu0 %v1572
        %v2010 = vpop.f32.mrf.mxu0
        %v2011 = vadd.f32 %v1625, %v2010
        %v2012 = vpop.f32.mrf.mxu0
        %v2013 = vadd.f32 %v1625, %v2012
        %2014 = vmatmul.bf16.gmra.mxu0 %v1574
        %v2015 = vpop.f32.mrf.mxu0
        %v2016 = vadd.f32 %v1625, %v2015
        %v2017 = vpop.f32.mrf.mxu0
        %v2018 = vadd.f32 %v1625, %v2017
        %2019 = vmatmul.bf16.gmra.mxu0 %v1576
        %v2020 = vpop.f32.mrf.mxu0
        %v2021 = vadd.f32 %v1625, %v2020
        %v2022 = vpop.f32.mrf.mxu0
        %v2023 = vadd.f32 %v1625, %v2022
        %2024 = vmatmul.bf16.gmra.mxu0 %v1578
        %v2025 = vpop.f32.mrf.mxu0
        %v2026 = vadd.f32 %v1625, %v2025
        %v2027 = vpop.f32.mrf.mxu0
        %v2028 = vadd.f32 %v1625, %v2027
        %2029 = vmatmul.bf16.gmra.mxu0 %v1580
        %v2030 = vpop.f32.mrf.mxu0
        %v2031 = vadd.f32 %v1625, %v2030
        %v2032 = vpop.f32.mrf.mxu0
        %v2033 = vadd.f32 %v1625, %v2032
        %2034 = vmatmul.bf16.gmra.mxu0 %v1582
        %v2035 = vpop.f32.mrf.mxu0
        %v2036 = vadd.f32 %v1625, %v2035
        %v2037 = vpop.f32.mrf.mxu0
        %v2038 = vadd.f32 %v1625, %v2037
        %2039 = vmatmul.bf16.gmra.mxu0 %v1584
        %v2040 = vpop.f32.mrf.mxu0
        %v2041 = vadd.f32 %v1625, %v2040
        %v2042 = vpop.f32.mrf.mxu0
        %v2043 = vadd.f32 %v1625, %v2042
        %2044 = vmatmul.bf16.gmra.mxu0 %v1586
        %v2045 = vpop.f32.mrf.mxu0
        %v2046 = vadd.f32 %v1625, %v2045
        %v2047 = vpop.f32.mrf.mxu0
        %v2048 = vadd.f32 %v1625, %v2047
        %2049 = vmatmul.bf16.gmra.mxu0 %v1588
        %v2050 = vpop.f32.mrf.mxu0
        %v2051 = vadd.f32 %v1625, %v2050
        %v2052 = vpop.f32.mrf.mxu0
        %v2053 = vadd.f32 %v1625, %v2052
        %2054 = vdwg.mxu0
        %2055 = vmatpush.bf16.msra.mxu0 %v1755
        %2056 = vmatpush.bf16.msra.mxu0 %v1753
        %2057 = vmatpush.bf16.msra.mxu0 %v1751
        %2058 = vmatpush.bf16.msra.mxu0 %v1749
        %2059 = vmatpush.bf16.msra.mxu0 %v1747
        %2060 = vmatpush.bf16.msra.mxu0 %v1745
        %2061 = vmatpush.bf16.msra.mxu0 %v1743
        %2062 = vmatpush.bf16.msra.mxu0 %v1741
        %2063 = vmatmul.bf16.gmra.mxu0 %v1559
        %v2064 = vpop.f32.mrf.mxu0
        %v2065 = vadd.f32 %v1976, %v2064
        %v2066 = vpop.f32.mrf.mxu0
        %v2067 = vadd.f32 %v1978, %v2066
        %2068 = vmatmul.bf16.gmra.mxu0 %v1561
        %v2069 = vpop.f32.mrf.mxu0
        %v2070 = vadd.f32 %v1981, %v2069
        %v2071 = vpop.f32.mrf.mxu0
        %v2072 = vadd.f32 %v1983, %v2071
        %2073 = vmatmul.bf16.gmra.mxu0 %v1563
        %v2074 = vpop.f32.mrf.mxu0
        %v2075 = vadd.f32 %v1986, %v2074
        %v2076 = vpop.f32.mrf.mxu0
        %v2077 = vadd.f32 %v1988, %v2076
        %2078 = vmatmul.bf16.gmra.mxu0 %v1565
        %v2079 = vpop.f32.mrf.mxu0
        %v2080 = vadd.f32 %v1991, %v2079
        %v2081 = vpop.f32.mrf.mxu0
        %v2082 = vadd.f32 %v1993, %v2081
        %2083 = vmatmul.bf16.gmra.mxu0 %v1567
        %v2084 = vpop.f32.mrf.mxu0
        %v2085 = vadd.f32 %v1996, %v2084
        %v2086 = vpop.f32.mrf.mxu0
        %v2087 = vadd.f32 %v1998, %v2086
        %2088 = vmatmul.bf16.gmra.mxu0 %v1569
        %v2089 = vpop.f32.mrf.mxu0
        %v2090 = vadd.f32 %v2001, %v2089
        %v2091 = vpop.f32.mrf.mxu0
        %v2092 = vadd.f32 %v2003, %v2091
        %2093 = vmatmul.bf16.gmra.mxu0 %v1571
        %v2094 = vpop.f32.mrf.mxu0
        %v2095 = vadd.f32 %v2006, %v2094
        %v2096 = vpop.f32.mrf.mxu0
        %v2097 = vadd.f32 %v2008, %v2096
        %2098 = vmatmul.bf16.gmra.mxu0 %v1573
        %v2099 = vpop.f32.mrf.mxu0
        %v2100 = vadd.f32 %v2011, %v2099
        %v2101 = vpop.f32.mrf.mxu0
        %v2102 = vadd.f32 %v2013, %v2101
        %2103 = vmatmul.bf16.gmra.mxu0 %v1575
        %v2104 = vpop.f32.mrf.mxu0
        %v2105 = vadd.f32 %v2016, %v2104
        %v2106 = vpop.f32.mrf.mxu0
        %v2107 = vadd.f32 %v2018, %v2106
        %2108 = vmatmul.bf16.gmra.mxu0 %v1577
        %v2109 = vpop.f32.mrf.mxu0
        %v2110 = vadd.f32 %v2021, %v2109
        %v2111 = vpop.f32.mrf.mxu0
        %v2112 = vadd.f32 %v2023, %v2111
        %2113 = vmatmul.bf16.gmra.mxu0 %v1579
        %v2114 = vpop.f32.mrf.mxu0
        %v2115 = vadd.f32 %v2026, %v2114
        %v2116 = vpop.f32.mrf.mxu0
        %v2117 = vadd.f32 %v2028, %v2116
        %2118 = vmatmul.bf16.gmra.mxu0 %v1581
        %v2119 = vpop.f32.mrf.mxu0
        %v2120 = vadd.f32 %v2031, %v2119
        %v2121 = vpop.f32.mrf.mxu0
        %v2122 = vadd.f32 %v2033, %v2121
        %2123 = vmatmul.bf16.gmra.mxu0 %v1583
        %v2124 = vpop.f32.mrf.mxu0
        %v2125 = vadd.f32 %v2036, %v2124
        %v2126 = vpop.f32.mrf.mxu0
        %v2127 = vadd.f32 %v2038, %v2126
        %2128 = vmatmul.bf16.gmra.mxu0 %v1585
        %v2129 = vpop.f32.mrf.mxu0
        %v2130 = vadd.f32 %v2041, %v2129
        %v2131 = vpop.f32.mrf.mxu0
        %v2132 = vadd.f32 %v2043, %v2131
        %2133 = vmatmul.bf16.gmra.mxu0 %v1587
        %v2134 = vpop.f32.mrf.mxu0
        %v2135 = vadd.f32 %v2046, %v2134
        %v2136 = vpop.f32.mrf.mxu0
        %v2137 = vadd.f32 %v2048, %v2136
        %2138 = vmatmul.bf16.gmra.mxu0 %v1589
        %v2139 = vpop.f32.mrf.mxu0
        %v2140 = vadd.f32 %v2051, %v2139
        %v2141 = vpop.f32.mrf.mxu0
        %v2142 = vadd.f32 %v2053, %v2141
        %2143 = vdwg.mxu0
        %v2144 = vmax.f32 %v1887, 0.0
        %v2145 = vmax.f32 %v2065, 0.0
        %v2146 = vmax.f32 %v1889, 0.0
        %v2147 = vmax.f32 %v2067, 0.0
        %v2148 = vmax.f32 %v1892, 0.0
        %v2149 = vmax.f32 %v2070, 0.0
        %v2150 = vmax.f32 %v1894, 0.0
        %v2151 = vmax.f32 %v2072, 0.0
        %v2152 = vmax.f32 %v1897, 0.0
        %v2153 = vmax.f32 %v2075, 0.0
        %v2154 = vmax.f32 %v1899, 0.0
        %v2155 = vmax.f32 %v2077, 0.0
        %v2156 = vmax.f32 %v1902, 0.0
        %v2157 = vmax.f32 %v2080, 0.0
        %v2158 = vmax.f32 %v1904, 0.0
        %v2159 = vmax.f32 %v2082, 0.0
        %v2160 = vmax.f32 %v1907, 0.0
        %v2161 = vmax.f32 %v2085, 0.0
        %v2162 = vmax.f32 %v1909, 0.0
        %v2163 = vmax.f32 %v2087, 0.0
        %v2164 = vmax.f32 %v1912, 0.0
        %v2165 = vmax.f32 %v2090, 0.0
        %v2166 = vmax.f32 %v1914, 0.0
        %v2167 = vmax.f32 %v2092, 0.0
        %v2168 = vmax.f32 %v1917, 0.0
        %v2169 = vmax.f32 %v2095, 0.0
        %v2170 = vmax.f32 %v1919, 0.0
        %v2171 = vmax.f32 %v2097, 0.0
        %v2172 = vmax.f32 %v1922, 0.0
        %v2173 = vmax.f32 %v2100, 0.0
        %v2174 = vmax.f32 %v1924, 0.0
        %v2175 = vmax.f32 %v2102, 0.0
        %v2176 = vmax.f32 %v1927, 0.0
        %v2177 = vmax.f32 %v2105, 0.0
        %v2178 = vmax.f32 %v1929, 0.0
        %v2179 = vmax.f32 %v2107, 0.0
        %v2180 = vmax.f32 %v1932, 0.0
        %v2181 = vmax.f32 %v2110, 0.0
        %v2182 = vmax.f32 %v1934, 0.0
        %v2183 = vmax.f32 %v2112, 0.0
        %v2184 = vmax.f32 %v1937, 0.0
        %v2185 = vmax.f32 %v2115, 0.0
        %v2186 = vmax.f32 %v1939, 0.0
        %v2187 = vmax.f32 %v2117, 0.0
        %v2188 = vmax.f32 %v1942, 0.0
        %v2189 = vmax.f32 %v2120, 0.0
        %v2190 = vmax.f32 %v1944, 0.0
        %v2191 = vmax.f32 %v2122, 0.0
        %v2192 = vmax.f32 %v1947, 0.0
        %v2193 = vmax.f32 %v2125, 0.0
        %v2194 = vmax.f32 %v1949, 0.0
        %v2195 = vmax.f32 %v2127, 0.0
        %v2196 = vmax.f32 %v1952, 0.0
        %v2197 = vmax.f32 %v2130, 0.0
        %v2198 = vmax.f32 %v1954, 0.0
        %v2199 = vmax.f32 %v2132, 0.0
        %v2200 = vmax.f32 %v1957, 0.0
        %v2201 = vmax.f32 %v2135, 0.0
        %v2202 = vmax.f32 %v1959, 0.0
        %v2203 = vmax.f32 %v2137, 0.0
        %v2204 = vmax.f32 %v1962, 0.0
        %v2205 = vmax.f32 %v2140, 0.0
        %v2206 = vmax.f32 %v1964, 0.0
        %v2207 = vmax.f32 %v2142, 0.0
        %v2208 = vpack.c.bf16 %v2146, %v2144
        %v2209 = vpack.c.bf16 %v2147, %v2145
        %v2210 = vpack.c.bf16 %v2150, %v2148
        %v2211 = vpack.c.bf16 %v2151, %v2149
        %v2212 = vpack.c.bf16 %v2154, %v2152
        %v2213 = vpack.c.bf16 %v2155, %v2153
        %v2214 = vpack.c.bf16 %v2158, %v2156
        %v2215 = vpack.c.bf16 %v2159, %v2157
        %v2216 = vpack.c.bf16 %v2162, %v2160
        %v2217 = vpack.c.bf16 %v2163, %v2161
        %v2218 = vpack.c.bf16 %v2166, %v2164
        %v2219 = vpack.c.bf16 %v2167, %v2165
        %v2220 = vpack.c.bf16 %v2170, %v2168
        %v2221 = vpack.c.bf16 %v2171, %v2169
        %v2222 = vpack.c.bf16 %v2174, %v2172
        %v2223 = vpack.c.bf16 %v2175, %v2173
        %v2224 = vpack.c.bf16 %v2178, %v2176
        %v2225 = vpack.c.bf16 %v2179, %v2177
        %v2226 = vpack.c.bf16 %v2182, %v2180
        %v2227 = vpack.c.bf16 %v2183, %v2181
        %v2228 = vpack.c.bf16 %v2186, %v2184
        %v2229 = vpack.c.bf16 %v2187, %v2185
        %v2230 = vpack.c.bf16 %v2190, %v2188
        %v2231 = vpack.c.bf16 %v2191, %v2189
        %v2232 = vpack.c.bf16 %v2194, %v2192
        %v2233 = vpack.c.bf16 %v2195, %v2193
        %v2234 = vpack.c.bf16 %v2198, %v2196
        %v2235 = vpack.c.bf16 %v2199, %v2197
        %v2236 = vpack.c.bf16 %v2202, %v2200
        %v2237 = vpack.c.bf16 %v2203, %v2201
        %v2238 = vpack.c.bf16 %v2206, %v2204
        %v2239 = vpack.c.bf16 %v2207, %v2205
        %v2240 = vld [vmem:[#allocation11] sm:$0xf]
        %v2241 = vld [vmem:[#allocation11 + $0x4] sm:$0xf]
        %v2242 = vld [vmem:[#allocation11 + $0x8] sm:$0xf]
        %v2243 = vld [vmem:[#allocation11 + $0xc] sm:$0xf]
        %v2244 = vld [vmem:[#allocation11 + $0x10] sm:$0xf]
        %v2245 = vld [vmem:[#allocation11 + $0x14] sm:$0xf]
        %v2246 = vld [vmem:[#allocation11 + $0x18] sm:$0xf]
        %v2247 = vld [vmem:[#allocation11 + $0x1c] sm:$0xf]
        %v2248 = vld [vmem:[#allocation11 + $0x20] sm:$0xf]
        %v2249 = vld [vmem:[#allocation11 + $0x24] sm:$0xf]
        %v2250 = vld [vmem:[#allocation11 + $0x28] sm:$0xf]
        %v2251 = vld [vmem:[#allocation11 + $0x2c] sm:$0xf]
        %v2252 = vld [vmem:[#allocation11 + $0x30] sm:$0xf]
        %v2253 = vld [vmem:[#allocation11 + $0x34] sm:$0xf]
        %v2254 = vld [vmem:[#allocation11 + $0x38] sm:$0xf]
        %v2255 = vld [vmem:[#allocation11 + $0x3c] sm:$0xf]
        %v2256 = vld [vmem:[#allocation11 + $0x40] sm:$0xf]
        %v2257 = vld [vmem:[#allocation11 + $0x44] sm:$0xf]
        %v2258 = vld [vmem:[#allocation11 + $0x48] sm:$0xf]
        %v2259 = vld [vmem:[#allocation11 + $0x4c] sm:$0xf]
        %v2260 = vld [vmem:[#allocation11 + $0x50] sm:$0xf]
        %v2261 = vld [vmem:[#allocation11 + $0x54] sm:$0xf]
        %v2262 = vld [vmem:[#allocation11 + $0x58] sm:$0xf]
        %v2263 = vld [vmem:[#allocation11 + $0x5c] sm:$0xf]
        %v2264 = vld [vmem:[#allocation11 + $0x60] sm:$0xf]
        %v2265 = vld [vmem:[#allocation11 + $0x64] sm:$0xf]
        %v2266 = vld [vmem:[#allocation11 + $0x68] sm:$0xf]
        %v2267 = vld [vmem:[#allocation11 + $0x6c] sm:$0xf]
        %v2268 = vld [vmem:[#allocation11 + $0x70] sm:$0xf]
        %v2269 = vld [vmem:[#allocation11 + $0x74] sm:$0xf]
        %v2270 = vld [vmem:[#allocation11 + $0x78] sm:$0xf]
        %v2271 = vld [vmem:[#allocation11 + $0x7c] sm:$0xf]
        %v2272 = vld [vmem:[%s8] sm:$0x1]
        %v2274 = vperm.slane %v2272, 0
        %v2308 = vunpack.c.l.b16 %v2240
        %v2309 = vunpack.c.l.b16 %v2241
        %v2310 = vunpack.c.l.b16 %v2242
        %v2311 = vunpack.c.l.b16 %v2243
        %v2312 = vunpack.c.l.b16 %v2244
        %v2313 = vunpack.c.l.b16 %v2245
        %v2314 = vunpack.c.l.b16 %v2246
        %v2315 = vunpack.c.l.b16 %v2247
        %v2316 = vunpack.c.l.b16 %v2248
        %v2317 = vunpack.c.l.b16 %v2249
        %v2318 = vunpack.c.l.b16 %v2250
        %v2319 = vunpack.c.l.b16 %v2251
        %v2320 = vunpack.c.l.b16 %v2252
        %v2321 = vunpack.c.l.b16 %v2253
        %v2322 = vunpack.c.l.b16 %v2254
        %v2323 = vunpack.c.l.b16 %v2255
        %v2324 = vunpack.c.l.b16 %v2256
        %v2325 = vunpack.c.l.b16 %v2257
        %v2326 = vunpack.c.l.b16 %v2258
        %v2327 = vunpack.c.l.b16 %v2259
        %v2328 = vunpack.c.l.b16 %v2260
        %v2329 = vunpack.c.l.b16 %v2261
        %v2330 = vunpack.c.l.b16 %v2262
        %v2331 = vunpack.c.l.b16 %v2263
        %v2332 = vunpack.c.l.b16 %v2264
        %v2333 = vunpack.c.l.b16 %v2265
        %v2334 = vunpack.c.l.b16 %v2266
        %v2335 = vunpack.c.l.b16 %v2267
        %v2336 = vunpack.c.l.b16 %v2268
        %v2337 = vunpack.c.l.b16 %v2269
        %v2338 = vunpack.c.l.b16 %v2270
        %v2339 = vunpack.c.l.b16 %v2271
        %v2340 = vpack.c.b16 %v2309, %v2308
        %v2341 = vpack.c.b16 %v2311, %v2310
        %v2342 = vpack.c.b16 %v2313, %v2312
        %v2343 = vpack.c.b16 %v2315, %v2314
        %v2344 = vpack.c.b16 %v2317, %v2316
        %v2345 = vpack.c.b16 %v2319, %v2318
        %v2346 = vpack.c.b16 %v2321, %v2320
        %v2347 = vpack.c.b16 %v2323, %v2322
        %v2348 = vpack.c.b16 %v2325, %v2324
        %v2349 = vpack.c.b16 %v2327, %v2326
        %v2350 = vpack.c.b16 %v2329, %v2328
        %v2351 = vpack.c.b16 %v2331, %v2330
        %v2352 = vpack.c.b16 %v2333, %v2332
        %v2353 = vpack.c.b16 %v2335, %v2334
        %v2354 = vpack.c.b16 %v2337, %v2336
        %v2355 = vpack.c.b16 %v2339, %v2338
        %2372 = vmatpush.bf16.msra.mxu0 %v2347
        %2373 = vmatpush.bf16.msra.mxu0 %v2346
        %2374 = vmatpush.bf16.msra.mxu0 %v2345
        %2375 = vmatpush.bf16.msra.mxu0 %v2344
        %2376 = vmatpush.bf16.msra.mxu0 %v2343
        %2377 = vmatpush.bf16.msra.mxu0 %v2342
        %2378 = vmatpush.bf16.msra.mxu0 %v2341
        %2379 = vmatpush.bf16.msra.mxu0 %v2340
        %2380 = vmatmul.bf16.gmra.mxu0 %v2208
        %v2381 = vpop.f32.mrf.mxu0
        %v2382 = vadd.f32 %v2274, %v2381
        %v2383 = vpop.f32.mrf.mxu0
        %v2384 = vadd.f32 %v2274, %v2383
        %2385 = vmatmul.bf16.gmra.mxu0 %v2210
        %v2386 = vpop.f32.mrf.mxu0
        %v2387 = vadd.f32 %v2274, %v2386
        %v2388 = vpop.f32.mrf.mxu0
        %v2389 = vadd.f32 %v2274, %v2388
        %2390 = vmatmul.bf16.gmra.mxu0 %v2212
        %v2391 = vpop.f32.mrf.mxu0
        %v2392 = vadd.f32 %v2274, %v2391
        %v2393 = vpop.f32.mrf.mxu0
        %v2394 = vadd.f32 %v2274, %v2393
        %2395 = vmatmul.bf16.gmra.mxu0 %v2214
        %v2396 = vpop.f32.mrf.mxu0
        %v2397 = vadd.f32 %v2274, %v2396
        %v2398 = vpop.f32.mrf.mxu0
        %v2399 = vadd.f32 %v2274, %v2398
        %2400 = vmatmul.bf16.gmra.mxu0 %v2216
        %v2401 = vpop.f32.mrf.mxu0
        %v2402 = vadd.f32 %v2274, %v2401
        %v2403 = vpop.f32.mrf.mxu0
        %v2404 = vadd.f32 %v2274, %v2403
        %2405 = vmatmul.bf16.gmra.mxu0 %v2218
        %v2406 = vpop.f32.mrf.mxu0
        %v2407 = vadd.f32 %v2274, %v2406
        %v2408 = vpop.f32.mrf.mxu0
        %v2409 = vadd.f32 %v2274, %v2408
        %2410 = vmatmul.bf16.gmra.mxu0 %v2220
        %v2411 = vpop.f32.mrf.mxu0
        %v2412 = vadd.f32 %v2274, %v2411
        %v2413 = vpop.f32.mrf.mxu0
        %v2414 = vadd.f32 %v2274, %v2413
        %2415 = vmatmul.bf16.gmra.mxu0 %v2222
        %v2416 = vpop.f32.mrf.mxu0
        %v2417 = vadd.f32 %v2274, %v2416
        %v2418 = vpop.f32.mrf.mxu0
        %v2419 = vadd.f32 %v2274, %v2418
        %2420 = vmatmul.bf16.gmra.mxu0 %v2224
        %v2421 = vpop.f32.mrf.mxu0
        %v2422 = vadd.f32 %v2274, %v2421
        %v2423 = vpop.f32.mrf.mxu0
        %v2424 = vadd.f32 %v2274, %v2423
        %2425 = vmatmul.bf16.gmra.mxu0 %v2226
        %v2426 = vpop.f32.mrf.mxu0
        %v2427 = vadd.f32 %v2274, %v2426
        %v2428 = vpop.f32.mrf.mxu0
        %v2429 = vadd.f32 %v2274, %v2428
        %2430 = vmatmul.bf16.gmra.mxu0 %v2228
        %v2431 = vpop.f32.mrf.mxu0
        %v2432 = vadd.f32 %v2274, %v2431
        %v2433 = vpop.f32.mrf.mxu0
        %v2434 = vadd.f32 %v2274, %v2433
        %2435 = vmatmul.bf16.gmra.mxu0 %v2230
        %v2436 = vpop.f32.mrf.mxu0
        %v2437 = vadd.f32 %v2274, %v2436
        %v2438 = vpop.f32.mrf.mxu0
        %v2439 = vadd.f32 %v2274, %v2438
        %2440 = vmatmul.bf16.gmra.mxu0 %v2232
        %v2441 = vpop.f32.mrf.mxu0
        %v2442 = vadd.f32 %v2274, %v2441
        %v2443 = vpop.f32.mrf.mxu0
        %v2444 = vadd.f32 %v2274, %v2443
        %2445 = vmatmul.bf16.gmra.mxu0 %v2234
        %v2446 = vpop.f32.mrf.mxu0
        %v2447 = vadd.f32 %v2274, %v2446
        %v2448 = vpop.f32.mrf.mxu0
        %v2449 = vadd.f32 %v2274, %v2448
        %2450 = vmatmul.bf16.gmra.mxu0 %v2236
        %v2451 = vpop.f32.mrf.mxu0
        %v2452 = vadd.f32 %v2274, %v2451
        %v2453 = vpop.f32.mrf.mxu0
        %v2454 = vadd.f32 %v2274, %v2453
        %2455 = vmatmul.bf16.gmra.mxu0 %v2238
        %v2456 = vpop.f32.mrf.mxu0
        %v2457 = vadd.f32 %v2274, %v2456
        %v2458 = vpop.f32.mrf.mxu0
        %v2459 = vadd.f32 %v2274, %v2458
        %2460 = vdwg.mxu0
        %2461 = vmatpush.bf16.msra.mxu0 %v2355
        %2462 = vmatpush.bf16.msra.mxu0 %v2354
        %2463 = vmatpush.bf16.msra.mxu0 %v2353
        %2464 = vmatpush.bf16.msra.mxu0 %v2352
        %2465 = vmatpush.bf16.msra.mxu0 %v2351
        %2466 = vmatpush.bf16.msra.mxu0 %v2350
        %2467 = vmatpush.bf16.msra.mxu0 %v2349
        %2468 = vmatpush.bf16.msra.mxu0 %v2348
        %2469 = vmatmul.bf16.gmra.mxu0 %v2209
        %v2470 = vpop.f32.mrf.mxu0
        %v2471 = vadd.f32 %v2382, %v2470
        %v2472 = vpop.f32.mrf.mxu0
        %v2473 = vadd.f32 %v2384, %v2472
        %2474 = vmatmul.bf16.gmra.mxu0 %v2211
        %v2475 = vpop.f32.mrf.mxu0
        %v2476 = vadd.f32 %v2387, %v2475
        %v2477 = vpop.f32.mrf.mxu0
        %v2478 = vadd.f32 %v2389, %v2477
        %2479 = vmatmul.bf16.gmra.mxu0 %v2213
        %v2480 = vpop.f32.mrf.mxu0
        %v2481 = vadd.f32 %v2392, %v2480
        %v2482 = vpop.f32.mrf.mxu0
        %v2483 = vadd.f32 %v2394, %v2482
        %2484 = vmatmul.bf16.gmra.mxu0 %v2215
        %v2485 = vpop.f32.mrf.mxu0
        %v2486 = vadd.f32 %v2397, %v2485
        %v2487 = vpop.f32.mrf.mxu0
        %v2488 = vadd.f32 %v2399, %v2487
        %2489 = vmatmul.bf16.gmra.mxu0 %v2217
        %v2490 = vpop.f32.mrf.mxu0
        %v2491 = vadd.f32 %v2402, %v2490
        %v2492 = vpop.f32.mrf.mxu0
        %v2493 = vadd.f32 %v2404, %v2492
        %2494 = vmatmul.bf16.gmra.mxu0 %v2219
        %v2495 = vpop.f32.mrf.mxu0
        %v2496 = vadd.f32 %v2407, %v2495
        %v2497 = vpop.f32.mrf.mxu0
        %v2498 = vadd.f32 %v2409, %v2497
        %2499 = vmatmul.bf16.gmra.mxu0 %v2221
        %v2500 = vpop.f32.mrf.mxu0
        %v2501 = vadd.f32 %v2412, %v2500
        %v2502 = vpop.f32.mrf.mxu0
        %v2503 = vadd.f32 %v2414, %v2502
        %2504 = vmatmul.bf16.gmra.mxu0 %v2223
        %v2505 = vpop.f32.mrf.mxu0
        %v2506 = vadd.f32 %v2417, %v2505
        %v2507 = vpop.f32.mrf.mxu0
        %v2508 = vadd.f32 %v2419, %v2507
        %2509 = vmatmul.bf16.gmra.mxu0 %v2225
        %v2510 = vpop.f32.mrf.mxu0
        %v2511 = vadd.f32 %v2422, %v2510
        %v2512 = vpop.f32.mrf.mxu0
        %v2513 = vadd.f32 %v2424, %v2512
        %2514 = vmatmul.bf16.gmra.mxu0 %v2227
        %v2515 = vpop.f32.mrf.mxu0
        %v2516 = vadd.f32 %v2427, %v2515
        %v2517 = vpop.f32.mrf.mxu0
        %v2518 = vadd.f32 %v2429, %v2517
        %2519 = vmatmul.bf16.gmra.mxu0 %v2229
        %v2520 = vpop.f32.mrf.mxu0
        %v2521 = vadd.f32 %v2432, %v2520
        %v2522 = vpop.f32.mrf.mxu0
        %v2523 = vadd.f32 %v2434, %v2522
        %2524 = vmatmul.bf16.gmra.mxu0 %v2231
        %v2525 = vpop.f32.mrf.mxu0
        %v2526 = vadd.f32 %v2437, %v2525
        %v2527 = vpop.f32.mrf.mxu0
        %v2528 = vadd.f32 %v2439, %v2527
        %2529 = vmatmul.bf16.gmra.mxu0 %v2233
        %v2530 = vpop.f32.mrf.mxu0
        %v2531 = vadd.f32 %v2442, %v2530
        %v2532 = vpop.f32.mrf.mxu0
        %v2533 = vadd.f32 %v2444, %v2532
        %2534 = vmatmul.bf16.gmra.mxu0 %v2235
        %v2535 = vpop.f32.mrf.mxu0
        %v2536 = vadd.f32 %v2447, %v2535
        %v2537 = vpop.f32.mrf.mxu0
        %v2538 = vadd.f32 %v2449, %v2537
        %2539 = vmatmul.bf16.gmra.mxu0 %v2237
        %v2540 = vpop.f32.mrf.mxu0
        %v2541 = vadd.f32 %v2452, %v2540
        %v2542 = vpop.f32.mrf.mxu0
        %v2543 = vadd.f32 %v2454, %v2542
        %2544 = vmatmul.bf16.gmra.mxu0 %v2239
        %v2545 = vpop.f32.mrf.mxu0
        %v2546 = vadd.f32 %v2457, %v2545
        %v2547 = vpop.f32.mrf.mxu0
        %v2548 = vadd.f32 %v2459, %v2547
        %2549 = vdwg.mxu0
        %2550 = vmax.xlane.f32.xlu0 %v2471
        %v2551 = vpop.xlane.xlu0 %2550
        %2552 = vmax.xlane.f32.xlu0 %v2473
        %v2553 = vpop.xlane.xlu0 %2552
        %2554 = vmax.xlane.f32.xlu0 %v2476
        %v2555 = vpop.xlane.xlu0 %2554
        %2556 = vmax.xlane.f32.xlu0 %v2478
        %v2557 = vpop.xlane.xlu0 %2556
        %2558 = vmax.xlane.f32.xlu0 %v2481
        %v2559 = vpop.xlane.xlu0 %2558
        %2560 = vmax.xlane.f32.xlu0 %v2483
        %v2561 = vpop.xlane.xlu0 %2560
        %2562 = vmax.xlane.f32.xlu0 %v2486
        %v2563 = vpop.xlane.xlu0 %2562
        %2564 = vmax.xlane.f32.xlu0 %v2488
        %v2565 = vpop.xlane.xlu0 %2564
        %2566 = vmax.xlane.f32.xlu0 %v2491
        %v2567 = vpop.xlane.xlu0 %2566
        %2568 = vmax.xlane.f32.xlu0 %v2493
        %v2569 = vpop.xlane.xlu0 %2568
        %2570 = vmax.xlane.f32.xlu0 %v2496
        %v2571 = vpop.xlane.xlu0 %2570
        %2572 = vmax.xlane.f32.xlu0 %v2498
        %v2573 = vpop.xlane.xlu0 %2572
        %2574 = vmax.xlane.f32.xlu0 %v2501
        %v2575 = vpop.xlane.xlu0 %2574
        %2576 = vmax.xlane.f32.xlu0 %v2503
        %v2577 = vpop.xlane.xlu0 %2576
        %2578 = vmax.xlane.f32.xlu0 %v2506
        %v2579 = vpop.xlane.xlu0 %2578
        %2580 = vmax.xlane.f32.xlu0 %v2508
        %v2581 = vpop.xlane.xlu0 %2580
        %2582 = vmax.xlane.f32.xlu0 %v2511
        %v2583 = vpop.xlane.xlu0 %2582
        %2584 = vmax.xlane.f32.xlu0 %v2513
        %v2585 = vpop.xlane.xlu0 %2584
        %2586 = vmax.xlane.f32.xlu0 %v2516
        %v2587 = vpop.xlane.xlu0 %2586
        %2588 = vmax.xlane.f32.xlu0 %v2518
        %v2589 = vpop.xlane.xlu0 %2588
        %2590 = vmax.xlane.f32.xlu0 %v2521
        %v2591 = vpop.xlane.xlu0 %2590
        %2592 = vmax.xlane.f32.xlu0 %v2523
        %v2593 = vpop.xlane.xlu0 %2592
        %2594 = vmax.xlane.f32.xlu0 %v2526
        %v2595 = vpop.xlane.xlu0 %2594
        %2596 = vmax.xlane.f32.xlu0 %v2528
        %v2597 = vpop.xlane.xlu0 %2596
        %2598 = vmax.xlane.f32.xlu0 %v2531
        %v2599 = vpop.xlane.xlu0 %2598
        %2600 = vmax.xlane.f32.xlu0 %v2533
        %v2601 = vpop.xlane.xlu0 %2600
        %2602 = vmax.xlane.f32.xlu0 %v2536
        %v2603 = vpop.xlane.xlu0 %2602
        %2604 = vmax.xlane.f32.xlu0 %v2538
        %v2605 = vpop.xlane.xlu0 %2604
        %2606 = vmax.xlane.f32.xlu0 %v2541
        %v2607 = vpop.xlane.xlu0 %2606
        %2608 = vmax.xlane.f32.xlu0 %v2543
        %v2609 = vpop.xlane.xlu0 %2608
        %2610 = vmax.xlane.f32.xlu0 %v2546
        %v2611 = vpop.xlane.xlu0 %2610
        %2612 = vmax.xlane.f32.xlu0 %v2548
        %v2613 = vpop.xlane.xlu0 %2612
        %v2614 = vsub.f32 %v2471, %v2551
        %v2615 = vsub.f32 %v2473, %v2553
        %v2616 = vsub.f32 %v2476, %v2555
        %v2617 = vsub.f32 %v2478, %v2557
        %v2618 = vsub.f32 %v2481, %v2559
        %v2619 = vsub.f32 %v2483, %v2561
        %v2620 = vsub.f32 %v2486, %v2563
        %v2621 = vsub.f32 %v2488, %v2565
        %v2622 = vsub.f32 %v2491, %v2567
        %v2623 = vsub.f32 %v2493, %v2569
        %v2624 = vsub.f32 %v2496, %v2571
        %v2625 = vsub.f32 %v2498, %v2573
        %v2626 = vsub.f32 %v2501, %v2575
        %v2627 = vsub.f32 %v2503, %v2577
        %v2628 = vsub.f32 %v2506, %v2579
        %v2629 = vsub.f32 %v2508, %v2581
        %v2630 = vsub.f32 %v2511, %v2583
        %v2631 = vsub.f32 %v2513, %v2585
        %v2632 = vsub.f32 %v2516, %v2587
        %v2633 = vsub.f32 %v2518, %v2589
        %v2634 = vsub.f32 %v2521, %v2591
        %v2635 = vsub.f32 %v2523, %v2593
        %v2636 = vsub.f32 %v2526, %v2595
        %v2637 = vsub.f32 %v2528, %v2597
        %v2638 = vsub.f32 %v2531, %v2599
        %v2639 = vsub.f32 %v2533, %v2601
        %v2640 = vsub.f32 %v2536, %v2603
        %v2641 = vsub.f32 %v2538, %v2605
        %v2642 = vsub.f32 %v2541, %v2607
        %v2643 = vsub.f32 %v2543, %v2609
        %v2644 = vsub.f32 %v2546, %v2611
        %v2645 = vsub.f32 %v2548, %v2613
        %v2646 = vmul.f32 %v2614, 1.442695
        %v2647 = vpow.pop %v2646
        %v2648 = vmul.f32 %v2615, 1.442695
        %v2649 = vpow.pop %v2648
        %v2650 = vmul.f32 %v2616, 1.442695
        %v2651 = vpow.pop %v2650
        %v2652 = vmul.f32 %v2617, 1.442695
        %v2653 = vpow.pop %v2652
        %v2654 = vmul.f32 %v2618, 1.442695
        %v2655 = vpow.pop %v2654
        %v2656 = vmul.f32 %v2619, 1.442695
        %v2657 = vpow.pop %v2656
        %v2658 = vmul.f32 %v2620, 1.442695
        %v2659 = vpow.pop %v2658
        %v2660 = vmul.f32 %v2621, 1.442695
        %v2661 = vpow.pop %v2660
        %v2662 = vmul.f32 %v2622, 1.442695
        %v2663 = vpow.pop %v2662
        %v2664 = vmul.f32 %v2623, 1.442695
        %v2665 = vpow.pop %v2664
        %v2666 = vmul.f32 %v2624, 1.442695
        %v2667 = vpow.pop %v2666
        %v2668 = vmul.f32 %v2625, 1.442695
        %v2669 = vpow.pop %v2668
        %v2670 = vmul.f32 %v2626, 1.442695
        %v2671 = vpow.pop %v2670
        %v2672 = vmul.f32 %v2627, 1.442695
        %v2673 = vpow.pop %v2672
        %v2674 = vmul.f32 %v2628, 1.442695
        %v2675 = vpow.pop %v2674
        %v2676 = vmul.f32 %v2629, 1.442695
        %v2677 = vpow.pop %v2676
        %v2678 = vmul.f32 %v2630, 1.442695
        %v2679 = vpow.pop %v2678
        %v2680 = vmul.f32 %v2631, 1.442695
        %v2681 = vpow.pop %v2680
        %v2682 = vmul.f32 %v2632, 1.442695
        %v2683 = vpow.pop %v2682
        %v2684 = vmul.f32 %v2633, 1.442695
        %v2685 = vpow.pop %v2684
        %v2686 = vmul.f32 %v2634, 1.442695
        %v2687 = vpow.pop %v2686
        %v2688 = vmul.f32 %v2635, 1.442695
        %v2689 = vpow.pop %v2688
        %v2690 = vmul.f32 %v2636, 1.442695
        %v2691 = vpow.pop %v2690
        %v2692 = vmul.f32 %v2637, 1.442695
        %v2693 = vpow.pop %v2692
        %v2694 = vmul.f32 %v2638, 1.442695
        %v2695 = vpow.pop %v2694
        %v2696 = vmul.f32 %v2639, 1.442695
        %v2697 = vpow.pop %v2696
        %v2698 = vmul.f32 %v2640, 1.442695
        %v2699 = vpow.pop %v2698
        %v2700 = vmul.f32 %v2641, 1.442695
        %v2701 = vpow.pop %v2700
        %v2702 = vmul.f32 %v2642, 1.442695
        %v2703 = vpow.pop %v2702
        %v2704 = vmul.f32 %v2643, 1.442695
        %v2705 = vpow.pop %v2704
        %v2706 = vmul.f32 %v2644, 1.442695
        %v2707 = vpow.pop %v2706
        %v2708 = vmul.f32 %v2645, 1.442695
        %v2709 = vpow.pop %v2708
        %2710 = vadd.xlane.f32.xlu0 %v2647
        %v2711 = vpop.xlane.xlu0 %2710
        %2712 = vadd.xlane.f32.xlu0 %v2649
        %v2713 = vpop.xlane.xlu0 %2712
        %2714 = vadd.xlane.f32.xlu0 %v2651
        %v2715 = vpop.xlane.xlu0 %2714
        %2716 = vadd.xlane.f32.xlu0 %v2653
        %v2717 = vpop.xlane.xlu0 %2716
        %2718 = vadd.xlane.f32.xlu0 %v2655
        %v2719 = vpop.xlane.xlu0 %2718
        %2720 = vadd.xlane.f32.xlu0 %v2657
        %v2721 = vpop.xlane.xlu0 %2720
        %2722 = vadd.xlane.f32.xlu0 %v2659
        %v2723 = vpop.xlane.xlu0 %2722
        %2724 = vadd.xlane.f32.xlu0 %v2661
        %v2725 = vpop.xlane.xlu0 %2724
        %2726 = vadd.xlane.f32.xlu0 %v2663
        %v2727 = vpop.xlane.xlu0 %2726
        %2728 = vadd.xlane.f32.xlu0 %v2665
        %v2729 = vpop.xlane.xlu0 %2728
        %2730 = vadd.xlane.f32.xlu0 %v2667
        %v2731 = vpop.xlane.xlu0 %2730
        %2732 = vadd.xlane.f32.xlu0 %v2669
        %v2733 = vpop.xlane.xlu0 %2732
        %2734 = vadd.xlane.f32.xlu0 %v2671
        %v2735 = vpop.xlane.xlu0 %2734
        %2736 = vadd.xlane.f32.xlu0 %v2673
        %v2737 = vpop.xlane.xlu0 %2736
        %2738 = vadd.xlane.f32.xlu0 %v2675
        %v2739 = vpop.xlane.xlu0 %2738
        %2740 = vadd.xlane.f32.xlu0 %v2677
        %v2741 = vpop.xlane.xlu0 %2740
        %2742 = vadd.xlane.f32.xlu0 %v2679
        %v2743 = vpop.xlane.xlu0 %2742
        %2744 = vadd.xlane.f32.xlu0 %v2681
        %v2745 = vpop.xlane.xlu0 %2744
        %2746 = vadd.xlane.f32.xlu0 %v2683
        %v2747 = vpop.xlane.xlu0 %2746
        %2748 = vadd.xlane.f32.xlu0 %v2685
        %v2749 = vpop.xlane.xlu0 %2748
        %2750 = vadd.xlane.f32.xlu0 %v2687
        %v2751 = vpop.xlane.xlu0 %2750
        %2752 = vadd.xlane.f32.xlu0 %v2689
        %v2753 = vpop.xlane.xlu0 %2752
        %2754 = vadd.xlane.f32.xlu0 %v2691
        %v2755 = vpop.xlane.xlu0 %2754
        %2756 = vadd.xlane.f32.xlu0 %v2693
        %v2757 = vpop.xlane.xlu0 %2756
        %2758 = vadd.xlane.f32.xlu0 %v2695
        %v2759 = vpop.xlane.xlu0 %2758
        %2760 = vadd.xlane.f32.xlu0 %v2697
        %v2761 = vpop.xlane.xlu0 %2760
        %2762 = vadd.xlane.f32.xlu0 %v2699
        %v2763 = vpop.xlane.xlu0 %2762
        %2764 = vadd.xlane.f32.xlu0 %v2701
        %v2765 = vpop.xlane.xlu0 %2764
        %2766 = vadd.xlane.f32.xlu0 %v2703
        %v2767 = vpop.xlane.xlu0 %2766
        %2768 = vadd.xlane.f32.xlu0 %v2705
        %v2769 = vpop.xlane.xlu0 %2768
        %2770 = vadd.xlane.f32.xlu0 %v2707
        %v2771 = vpop.xlane.xlu0 %2770
        %2772 = vadd.xlane.f32.xlu0 %v2709
        %v2773 = vpop.xlane.xlu0 %2772
        %v2774 = vrcp.pop %v2711
        %v2775 = vrcp.pop %v2713
        %v2776 = vrcp.pop %v2715
        %v2777 = vrcp.pop %v2717
        %v2778 = vrcp.pop %v2719
        %v2779 = vrcp.pop %v2721
        %v2780 = vrcp.pop %v2723
        %v2781 = vrcp.pop %v2725
        %v2782 = vrcp.pop %v2727
        %v2783 = vrcp.pop %v2729
        %v2784 = vrcp.pop %v2731
        %v2785 = vrcp.pop %v2733
        %v2786 = vrcp.pop %v2735
        %v2787 = vrcp.pop %v2737
        %v2788 = vrcp.pop %v2739
        %v2789 = vrcp.pop %v2741
        %v2790 = vrcp.pop %v2743
        %v2791 = vrcp.pop %v2745
        %v2792 = vrcp.pop %v2747
        %v2793 = vrcp.pop %v2749
        %v2794 = vrcp.pop %v2751
        %v2795 = vrcp.pop %v2753
        %v2796 = vrcp.pop %v2755
        %v2797 = vrcp.pop %v2757
        %v2798 = vrcp.pop %v2759
        %v2799 = vrcp.pop %v2761
        %v2800 = vrcp.pop %v2763
        %v2801 = vrcp.pop %v2765
        %v2802 = vrcp.pop %v2767
        %v2803 = vrcp.pop %v2769
        %v2804 = vrcp.pop %v2771
        %v2805 = vrcp.pop %v2773
        %v2806 = vmul.f32 %v2711, %v2774
        %v2807 = vmul.f32 %v2713, %v2775
        %v2808 = vmul.f32 %v2715, %v2776
        %v2809 = vmul.f32 %v2717, %v2777
        %v2810 = vmul.f32 %v2719, %v2778
        %v2811 = vmul.f32 %v2721, %v2779
        %v2812 = vmul.f32 %v2723, %v2780
        %v2813 = vmul.f32 %v2725, %v2781
        %v2814 = vmul.f32 %v2727, %v2782
        %v2815 = vmul.f32 %v2729, %v2783
        %v2816 = vmul.f32 %v2731, %v2784
        %v2817 = vmul.f32 %v2733, %v2785
        %v2818 = vmul.f32 %v2735, %v2786
        %v2819 = vmul.f32 %v2737, %v2787
        %v2820 = vmul.f32 %v2739, %v2788
        %v2821 = vmul.f32 %v2741, %v2789
        %v2822 = vmul.f32 %v2743, %v2790
        %v2823 = vmul.f32 %v2745, %v2791
        %v2824 = vmul.f32 %v2747, %v2792
        %v2825 = vmul.f32 %v2749, %v2793
        %v2826 = vmul.f32 %v2751, %v2794
        %v2827 = vmul.f32 %v2753, %v2795
        %v2828 = vmul.f32 %v2755, %v2796
        %v2829 = vmul.f32 %v2757, %v2797
        %v2830 = vmul.f32 %v2759, %v2798
        %v2831 = vmul.f32 %v2761, %v2799
        %v2832 = vmul.f32 %v2763, %v2800
        %v2833 = vmul.f32 %v2765, %v2801
        %v2834 = vmul.f32 %v2767, %v2802
        %v2835 = vmul.f32 %v2769, %v2803
        %v2836 = vmul.f32 %v2771, %v2804
        %v2837 = vmul.f32 %v2773, %v2805
        %v2838 = vsub.f32 2.0, %v2806
        %v2839 = vsub.f32 2.0, %v2807
        %v2840 = vsub.f32 2.0, %v2808
        %v2841 = vsub.f32 2.0, %v2809
        %v2842 = vsub.f32 2.0, %v2810
        %v2843 = vsub.f32 2.0, %v2811
        %v2844 = vsub.f32 2.0, %v2812
        %v2845 = vsub.f32 2.0, %v2813
        %v2846 = vsub.f32 2.0, %v2814
        %v2847 = vsub.f32 2.0, %v2815
        %v2848 = vsub.f32 2.0, %v2816
        %v2849 = vsub.f32 2.0, %v2817
        %v2850 = vsub.f32 2.0, %v2818
        %v2851 = vsub.f32 2.0, %v2819
        %v2852 = vsub.f32 2.0, %v2820
        %v2853 = vsub.f32 2.0, %v2821
        %v2854 = vsub.f32 2.0, %v2822
        %v2855 = vsub.f32 2.0, %v2823
        %v2856 = vsub.f32 2.0, %v2824
        %v2857 = vsub.f32 2.0, %v2825
        %v2858 = vsub.f32 2.0, %v2826
        %v2859 = vsub.f32 2.0, %v2827
        %v2860 = vsub.f32 2.0, %v2828
        %v2861 = vsub.f32 2.0, %v2829
        %v2862 = vsub.f32 2.0, %v2830
        %v2863 = vsub.f32 2.0, %v2831
        %v2864 = vsub.f32 2.0, %v2832
        %v2865 = vsub.f32 2.0, %v2833
        %v2866 = vsub.f32 2.0, %v2834
        %v2867 = vsub.f32 2.0, %v2835
        %v2868 = vsub.f32 2.0, %v2836
        %v2869 = vsub.f32 2.0, %v2837
        %v2870 = vmul.f32 %v2774, %v2838
        %v2871 = vmul.f32 %v2775, %v2839
        %v2872 = vmul.f32 %v2776, %v2840
        %v2873 = vmul.f32 %v2777, %v2841
        %v2874 = vmul.f32 %v2778, %v2842
        %v2875 = vmul.f32 %v2779, %v2843
        %v2876 = vmul.f32 %v2780, %v2844
        %v2877 = vmul.f32 %v2781, %v2845
        %v2878 = vmul.f32 %v2782, %v2846
        %v2879 = vmul.f32 %v2783, %v2847
        %v2880 = vmul.f32 %v2784, %v2848
        %v2881 = vmul.f32 %v2785, %v2849
        %v2882 = vmul.f32 %v2786, %v2850
        %v2883 = vmul.f32 %v2787, %v2851
        %v2884 = vmul.f32 %v2788, %v2852
        %v2885 = vmul.f32 %v2789, %v2853
        %v2886 = vmul.f32 %v2790, %v2854
        %v2887 = vmul.f32 %v2791, %v2855
        %v2888 = vmul.f32 %v2792, %v2856
        %v2889 = vmul.f32 %v2793, %v2857
        %v2890 = vmul.f32 %v2794, %v2858
        %v2891 = vmul.f32 %v2795, %v2859
        %v2892 = vmul.f32 %v2796, %v2860
        %v2893 = vmul.f32 %v2797, %v2861
        %v2894 = vmul.f32 %v2798, %v2862
        %v2895 = vmul.f32 %v2799, %v2863
        %v2896 = vmul.f32 %v2800, %v2864
        %v2897 = vmul.f32 %v2801, %v2865
        %v2898 = vmul.f32 %v2802, %v2866
        %v2899 = vmul.f32 %v2803, %v2867
        %v2900 = vmul.f32 %v2804, %v2868
        %v2901 = vmul.f32 %v2805, %v2869
        %v2902 = vmul.f32 %v2647, %v2870
        %v2903 = vmul.f32 %v2649, %v2871
        %v2904 = vmul.f32 %v2651, %v2872
        %v2905 = vmul.f32 %v2653, %v2873
        %v2906 = vmul.f32 %v2655, %v2874
        %v2907 = vmul.f32 %v2657, %v2875
        %v2908 = vmul.f32 %v2659, %v2876
        %v2909 = vmul.f32 %v2661, %v2877
        %v2910 = vmul.f32 %v2663, %v2878
        %v2911 = vmul.f32 %v2665, %v2879
        %v2912 = vmul.f32 %v2667, %v2880
        %v2913 = vmul.f32 %v2669, %v2881
        %v2914 = vmul.f32 %v2671, %v2882
        %v2915 = vmul.f32 %v2673, %v2883
        %v2916 = vmul.f32 %v2675, %v2884
        %v2917 = vmul.f32 %v2677, %v2885
        %v2918 = vmul.f32 %v2679, %v2886
        %v2919 = vmul.f32 %v2681, %v2887
        %v2920 = vmul.f32 %v2683, %v2888
        %v2921 = vmul.f32 %v2685, %v2889
        %v2922 = vmul.f32 %v2687, %v2890
        %v2923 = vmul.f32 %v2689, %v2891
        %v2924 = vmul.f32 %v2691, %v2892
        %v2925 = vmul.f32 %v2693, %v2893
        %v2926 = vmul.f32 %v2695, %v2894
        %v2927 = vmul.f32 %v2697, %v2895
        %v2928 = vmul.f32 %v2699, %v2896
        %v2929 = vmul.f32 %v2701, %v2897
        %v2930 = vmul.f32 %v2703, %v2898
        %v2931 = vmul.f32 %v2705, %v2899
        %v2932 = vmul.f32 %v2707, %v2900
        %v2933 = vmul.f32 %v2709, %v2901
        %2934 = vst [vmem:[%s433] sm:$0xff] %v2902
        %2935 = vst [vmem:[%s433 + $0x8] sm:$0xff] %v2903
        %2936 = vst [vmem:[%s433 + $0x10] sm:$0xff] %v2904
        %2937 = vst [vmem:[%s433 + $0x18] sm:$0xff] %v2905
        %2938 = vst [vmem:[%s433 + $0x20] sm:$0xff] %v2906
        %2939 = vst [vmem:[%s433 + $0x28] sm:$0xff] %v2907
        %2940 = vst [vmem:[%s433 + $0x30] sm:$0xff] %v2908
        %2941 = vst [vmem:[%s433 + $0x38] sm:$0xff] %v2909
        %2942 = vst [vmem:[%s433 + $0x40] sm:$0xff] %v2910
        %2943 = vst [vmem:[%s433 + $0x48] sm:$0xff] %v2911
        %2944 = vst [vmem:[%s433 + $0x50] sm:$0xff] %v2912
        %2945 = vst [vmem:[%s433 + $0x58] sm:$0xff] %v2913
        %2946 = vst [vmem:[%s433 + $0x60] sm:$0xff] %v2914
        %2947 = vst [vmem:[%s433 + $0x68] sm:$0xff] %v2915
        %2948 = vst [vmem:[%s433 + $0x70] sm:$0xff] %v2916
        %2949 = vst [vmem:[%s433 + $0x78] sm:$0xff] %v2917
        %2950 = vst [vmem:[%s433 + $0x80] sm:$0xff] %v2918
        %2951 = vst [vmem:[%s433 + $0x88] sm:$0xff] %v2919
        %2952 = vst [vmem:[%s433 + $0x90] sm:$0xff] %v2920
        %2953 = vst [vmem:[%s433 + $0x98] sm:$0xff] %v2921
        %2954 = vst [vmem:[%s433 + $0xa0] sm:$0xff] %v2922
        %2955 = vst [vmem:[%s433 + $0xa8] sm:$0xff] %v2923
        %2956 = vst [vmem:[%s433 + $0xb0] sm:$0xff] %v2924
        %2957 = vst [vmem:[%s433 + $0xb8] sm:$0xff] %v2925
        %2958 = vst [vmem:[%s433 + $0xc0] sm:$0xff] %v2926
        %2959 = vst [vmem:[%s433 + $0xc8] sm:$0xff] %v2927
        %2960 = vst [vmem:[%s433 + $0xd0] sm:$0xff] %v2928
        %2961 = vst [vmem:[%s433 + $0xd8] sm:$0xff] %v2929
        %2962 = vst [vmem:[%s433 + $0xe0] sm:$0xff] %v2930
        %2963 = vst [vmem:[%s433 + $0xe8] sm:$0xff] %v2931
        %2964 = vst [vmem:[%s433 + $0xf0] sm:$0xff] %v2932
        %2965 = vst [vmem:[%s433 + $0xf8] sm:$0xff] %v2933
        %s2966 = sand.u32 %s231, 1
        %s2967 = scalar_lea.sflag [#allocation4], %s2966
        %s2968 = sand.u32 %s231, 1
        %s2969 = smul.addr %s2968, 256
        %s2970 = scalar_lea.vmem [#allocation13], %s2969
        // Predicated region
        $region81: #{tpu_custom_call.1} parent=55 // pred_check
          %p2971 = pneg %p241
        $region82: #{tpu_custom_call.1} parent=55 // pred_check_branch
          %2973 = sbr.rel (%p2971) target = $region84
        $region83: #{tpu_custom_call.1} parent=55 // pred_region
          %s2974 = smul.u32 32, %s29
          %2976 = vsyncadd %s2967, 0
          %s2977 = smul.addr %s2974, 8
          %s2978 = scalar_lea.hbm %s9, %s2977
          %s2979 = sshll.u32 %s2970, 4
          %s2980 = int_to_ptr.vmem [resolvable:$true] %s2979
          %s2981 = sshll.u32 %s2978, 4
          %s2982 = int_to_ptr.hbm [resolvable:$true] %s2981
          %2987 = dma.vmem_to_hbm [thread:$0]  %s2980, 4096, %s2982, %s2967, 128, 128, 8
        $region84: #{tpu_custom_call.1} parent=55 // pred_fallthru
          _
      $region56: #{tpu_custom_call.1} parent=5 // pred_fallthru
        _
      %p2988 = scmp.le.s32.totalorder 2, %s24
      // Predicated region
      $region85: #{tpu_custom_call.1} parent=5 // pred_check
        %p2989 = pneg %p2988
      $region86: #{tpu_custom_call.1} parent=5 // pred_check_branch
        %2991 = sbr.rel (%p2989) target = $region88
      $region87: #{tpu_custom_call.1} parent=5 // pred_region
        %s2992 = ssub.s32 %s24, 2
        // Predicated region
        $region89: #{tpu_custom_call.1} parent=87 // pred_check
          %p2993 = pneg %p247
        $region90: #{tpu_custom_call.1} parent=87 // pred_check_branch
          %2995 = sbr.rel (%p2993) target = $region92
        $region91: #{tpu_custom_call.1} parent=87 // pred_region
          %s2996 = sand.u32 %s232, 1
          %s2997 = scalar_lea.sflag [#allocation4], %s2996
          %s2998 = sand.u32 %s232, 1
          %s2999 = smul.addr %s2998, 256
          %s3000 = scalar_lea.vmem [#allocation13], %s2999
          %3002 = dma.done %s2997, 4096
        $region92: #{tpu_custom_call.1} parent=87 // pred_fallthru
          _
      $region88: #{tpu_custom_call.1} parent=5 // pred_fallthru
        _
    $region6: #{tpu_custom_call.1} parent=1 // loop_footer
      %s28 = sadd.s32 1, %s24
    $region7: #{tpu_custom_call.1} parent=1 // loop_footer_branch
      %23 = sbr.rel target = $region3
    $region8: #{tpu_custom_call.1} parent=1 // loop_exit
      _
    %3003 = vsyncpa [#allocation3], 1
    %s3004 = scalar_lea.sflag [#allocation3], 1
    %3005 = vsyncpa %s3004, 1
    %3006 = vsyncpa [#allocation6], 1
    %3007 = vsyncpa [#allocation9], 1
    %3008 = vsyncpa [#allocation12], 1
    %3009 = vsyncpa [#allocation4], 1
    %s3010 = scalar_lea.sflag [#allocation4], 1
    %3011 = vsyncpa %s3010, 1

</llo_original>
